<compile_context>
chip_gen: v7x
topology: tpu7x:2x2x1
jax: 0.10.0
libtpu: 0.0.40
codegen_flags: <defaults>
</compile_context>

<pallas_src>
import numpy as np
import jax
import jax.numpy as jnp
from jax.experimental import pallas as pl
from jax.experimental.pallas import tpu as pltpu


def _round_up(x, m):
    return ((x + m - 1) // m) * m


# ----------------------------------------------------------------------------
# Anchor generation (mirrors __init__ base anchors + _generated_all_anchor +
# the `center_anchor` list built in forward()).  Pure numpy glue.
# ----------------------------------------------------------------------------
def make_base_anchors(ratios, anchor_sizes):
    ratios = np.asarray(ratios, np.float32)
    sizes = np.asarray(anchor_sizes, np.float32)
    h_ratios = np.sqrt(ratios)
    w_ratios = 1.0 / h_ratios
    ws = (w_ratios[:, None] * sizes[None, :]).reshape(-1)
    hs = (h_ratios[:, None] * sizes[None, :]).reshape(-1)
    base = np.stack([-ws, -hs, ws, hs], axis=1) / 2.0
    return np.round(base).astype(np.float32)


def make_center_anchors(base_anchors, H, W, feat_stride):
    # _generated_all_anchor(height=H*stride, width=W*stride), torch meshgrid default
    cell_x = np.arange(0, W * feat_stride, feat_stride, dtype=np.float32)
    cell_y = np.arange(0, H * feat_stride, feat_stride, dtype=np.float32)
    gx, gy = np.meshgrid(cell_x, cell_y, indexing="ij")
    cell = np.stack([gx.ravel(), gy.ravel(), gx.ravel(), gy.ravel()], 1)
    A = base_anchors.shape[0]
    K = cell.shape[0]
    anchor = base_anchors.reshape(1, A, 4) + cell.reshape(1, K, 4).transpose(1, 0, 2)
    anchor = anchor.reshape(K * A, 4)
    cx = (anchor[:, 2] + anchor[:, 0]) / 2.0
    cy = (anchor[:, 3] + anchor[:, 1]) / 2.0
    cw = anchor[:, 2] - anchor[:, 0]
    ch = anchor[:, 3] - anchor[:, 1]
    return np.stack([cx, cy, cw, ch], axis=1).astype(np.float32)      # (H*W*A, 4)


def make_decode_tables(center, H, W, Wp, A, Cpad):
    """Anchor scale/offset tables (H*Wp, Cpad) + (1, Cpad) linear-branch mask.

    Lane layout matches the fused loc|score matmul: lanes [0, 4A) are loc
    columns (4a+r); all other lanes (score / zero padding / wrap columns) are
    neutral (scale 1, offset 0, mask 'linear') and are sliced away in glue.
    """
    c = center.reshape(H, W, A, 4)
    cx, cy, cw, ch = c[..., 0], c[..., 1], c[..., 2], c[..., 3]
    sc4 = np.stack([cw, ch, cw, ch], axis=-1).reshape(H, W, 4 * A)
    of4 = np.stack([cx, cy, np.zeros_like(cx), np.zeros_like(cy)], -1).reshape(H, W, 4 * A)
    sc = np.ones((H, Wp, Cpad), np.float32)
    of = np.zeros((H, Wp, Cpad), np.float32)
    sc[:, :W, :4 * A] = sc4
    of[:, :W, :4 * A] = of4
    mask = np.ones((1, Cpad), np.float32)
    mask[0, :4 * A] = (np.arange(4 * A) % 4 < 2).astype(np.float32)   # 1 = linear, 0 = exp
    return sc.reshape(H * Wp, Cpad), of.reshape(H * Wp, Cpad), mask


# ----------------------------------------------------------------------------
# Pallas kernel: 3x3 conv (kx-im2col + 3 matmuls) + ReLU + fused loc|score
# 1x1 conv + ROI decode.
# ----------------------------------------------------------------------------
def make_rpn_kernel(Hblk, Wp, Cin, Cmid):
    L = Hblk * Wp            # output rows per grid step (incl. wrap columns)
    L2 = (Hblk + 2) * Wp     # rows of the kx-im2col scratch

    def kernel(p_ref, w1_ref, b1_ref, wc_ref, bc_ref, sc_ref, of_ref, mk_ref,
               ls_ref, rois_ref, col_ref):
        p = p_ref[0, 0]                                    # ((Hblk+3)*Wp, Cin) bf16

        # kx-im2col: 3 shifted copies into VMEM scratch (L2, 3*Cin), once.
        for kx in range(3):
            col_ref[:, kx * Cin:(kx + 1) * Cin] = p[kx:kx + L2, :]

        # 3x3 conv = 3 ky matmuls (K = 3*Cin); ky*Wp offsets are sublane-aligned.
        acc = jnp.dot(col_ref[pl.ds(0, L), :], w1_ref[0],
                      preferred_element_type=jnp.float32)
        for ky in (1, 2):
            acc = acc + jnp.dot(col_ref[pl.ds(ky * Wp, L), :], w1_ref[ky],
                                preferred_element_type=jnp.float32)
        h = jnp.maximum(acc + b1_ref[...], 0.0).astype(jnp.bfloat16)    # ReLU

        # Fused loc|score 1x1 conv, lane-padded to Cpad (>=128): lane-dense store.
        ls = jnp.dot(h, wc_ref[...], preferred_element_type=jnp.float32) + bc_ref[...]
        ls_ref[0] = ls

        # ROI decode (f32): lanes 4a+{0,1}: loc*wh + center ; 4a+{2,3}: exp(loc)*wh.
        lin = mk_ref[...] > 0.5
        rois_ref[0] = jnp.where(lin, ls, jnp.exp(ls)) * sc_ref[...] + of_ref[...]

    return kernel


def rpn_pallas(pblocks, w1col, b1, wcat, bcat, sc2d, of2d, mask2d, *,
               Hblk, Wp, Cin, Cmid, Cpad):
    N, nHb, Pb, _ = pblocks.shape
    L = Hblk * Wp
    H_Wp = nHb * L
    kernel = make_rpn_kernel(Hblk, Wp, Cin, Cmid)

    out_shape = (jax.ShapeDtypeStruct((N, H_Wp, Cpad), jnp.float32),   # loc|score slab
                 jax.ShapeDtypeStruct((N, H_Wp, Cpad), jnp.float32))   # rois slab

    # TODO(synk): constant-index weight/table blocks could use
    # pipeline_mode=pl.Buffered(1) to halve their resident VMEM on v7x.
    in_specs = [
        pl.BlockSpec((1, 1, Pb, Cin), lambda n, hb: (n, hb, 0, 0)),    # padded input blocks (bf16)
        pl.BlockSpec((3, 3 * Cin, Cmid), lambda n, hb: (0, 0, 0)),     # conv1 weights (bf16)
        pl.BlockSpec((1, Cmid), lambda n, hb: (0, 0)),                 # conv1 bias (f32)
        pl.BlockSpec((Cmid, Cpad), lambda n, hb: (0, 0)),              # fused loc|score weight (bf16)
        pl.BlockSpec((1, Cpad), lambda n, hb: (0, 0)),                 # fused bias (f32)
        pl.BlockSpec((L, Cpad), lambda n, hb: (hb, 0)),                # anchor w/h table
        pl.BlockSpec((L, Cpad), lambda n, hb: (hb, 0)),                # anchor cx/cy table
        pl.BlockSpec((1, Cpad), lambda n, hb: (0, 0)),                 # linear-branch mask
    ]
    out_specs = (
        pl.BlockSpec((1, L, Cpad), lambda n, hb: (n, hb, 0)),
        pl.BlockSpec((1, L, Cpad), lambda n, hb: (n, hb, 0)),
    )

    return pl.pallas_call(
        kernel,
        out_shape=out_shape,
        grid_spec=pltpu.PrefetchScalarGridSpec(
            num_scalar_prefetch=0, grid=(N, nHb),
            in_specs=in_specs, out_specs=out_specs,
            scratch_shapes=[pltpu.VMEM(((Hblk + 2) * Wp, 3 * Cin), jnp.bfloat16)]),
        compiler_params=pltpu.CompilerParams(
            dimension_semantics=("parallel", "parallel"),
            vmem_limit_bytes=48 * 1024 * 1024),
    )(pblocks, w1col, b1, wcat, bcat, sc2d, of2d, mask2d)


# ----------------------------------------------------------------------------
# Full forward (glue + kernel).  x is NCHW like the PyTorch module.
# ----------------------------------------------------------------------------
def rpn_forward(x_nchw, params, sc2d, of2d, mask2d, *, A, Hblk):
    N, Cin, H, W = x_nchw.shape
    Cmid = params["b1"].shape[-1]
    Cpad = params["wcat"].shape[-1]
    assert H % Hblk == 0, "Hblk must divide H"
    nHb = H // Hblk
    Wp = _round_up(W + 2, 8)          # padded row width (sublane-aligned)

    x_nhwc = jnp.transpose(x_nchw, (0, 2, 3, 1)).astype(jnp.bfloat16)
    # conv padding=1 (top/bottom/left) + right zero-pad out to Wp.
    xp = jnp.pad(x_nhwc, ((0, 0), (1, 1), (1, Wp - W - 1), (0, 0)))    # (N, H+2, Wp, Cin)
    # Overlapping H row-blocks with a 2-row halo + 1 slack row each.
    blocks = jnp.stack([xp[:, hb * Hblk: hb * Hblk + Hblk + 2]
                        for hb in range(nHb)], axis=1)                 # (N, nHb, Hblk+2, Wp, Cin)
    blocks = jnp.pad(blocks, ((0, 0), (0, 0), (0, 1), (0, 0), (0, 0)))
    pblocks = blocks.reshape(N, nHb, (Hblk + 3) * Wp, Cin)

    ls, rois = rpn_pallas(pblocks, params["w1"], params["b1"],
                          params["wcat"], params["bcat"], sc2d, of2d, mask2d,
                          Hblk=Hblk, Wp=Wp, Cin=Cin, Cmid=Cmid, Cpad=Cpad)

    # Drop wrap columns / padding lanes; flatten like permute(0,2,3,1).view(-1, k).
    ls = ls.reshape(N, H, Wp, Cpad)[:, :, :W, :]
    rois = rois.reshape(N, H, Wp, Cpad)[:, :, :W, :]
    loc_output = ls[..., :4 * A].reshape(-1, 4)
    cls_output = ls[..., 4 * A:6 * A].reshape(-1, 2)
    rois_out = rois[..., :4 * A].reshape(-1, 4)
    return loc_output, cls_output, rois_out


# ----------------------------------------------------------------------------
# Pure-JAX f32 reference for verification.
# ----------------------------------------------------------------------------
def rpn_reference(x_nchw, w1_oihw, b1, wl, bl, wsc, bsc, center, A):
    hi = jax.lax.Precision.HIGHEST
    conv = jax.lax.conv_general_dilated(
        x_nchw, w1_oihw, (1, 1), ((1, 1), (1, 1)),
        dimension_numbers=("NCHW", "OIHW", "NCHW"), precision=hi)
    h = jnp.maximum(conv + b1[None, :, None, None], 0.0)
    h_nhwc = jnp.transpose(h, (0, 2, 3, 1))
    loc = jnp.einsum("nhwc,ck->nhwk", h_nhwc, wl, precision=hi) + bl
    score = jnp.einsum("nhwc,ck->nhwk", h_nhwc, wsc, precision=hi) + bsc
    loc_output = loc.reshape(-1, 4)
    cls_output = score.reshape(-1, 2)
    c = jnp.asarray(center)
    rois = jnp.stack([loc_output[:, 0] * c[:, 2] + c[:, 0],
                      loc_output[:, 1] * c[:, 3] + c[:, 1],
                      jnp.exp(loc_output[:, 2]) * c[:, 2],
                      jnp.exp(loc_output[:, 3]) * c[:, 3]], axis=1)
    return loc_output, cls_output, rois


if __name__ == "__main__":
    # Small but representative shapes.
    # TODO(synk): the PyTorch forward indexes center_anchor with the flat loc
    # row index, so it only works for batch N == 1; we mirror that here.
    N, Cin, Cmid, H, W = 1, 32, 32, 8, 8
    Hblk = 4                                          # 2 H-blocks -> 2-wide parallel grid axis
    feat_stride = 16
    ratios = [0.5, 1.0, 2.0]
    anchor_sizes = [32, 64, 128, 256, 512]

    base = make_base_anchors(ratios, anchor_sizes)
    A = base.shape[0]                                 # 15 anchors / location
    Wp = _round_up(W + 2, 8)
    Cpad = _round_up(6 * A, 128)                      # fused loc|score lane width (128)

    center = make_center_anchors(base, H, W, feat_stride)          # (H*W*A, 4)
    sc_np, of_np, mask_np = make_decode_tables(center, H, W, Wp, A, Cpad)

    key = jax.random.PRNGKey(0)
    kx_, kw1, kb1, kwl, kbl, kws, kbs = jax.random.split(key, 7)
    x = jax.random.normal(kx_, (N, Cin, H, W), jnp.float32)        # NCHW like torch
    w1_oihw = 0.01 * jax.random.normal(kw1, (Cmid, Cin, 3, 3), jnp.float32)
    b1 = 0.01 * jax.random.normal(kb1, (Cmid,), jnp.float32)
    wl = 0.01 * jax.random.normal(kwl, (Cmid, 4 * A), jnp.float32)
    bl = 0.01 * jax.random.normal(kbl, (4 * A,), jnp.float32)
    wsc = 0.01 * jax.random.normal(kws, (Cmid, 2 * A), jnp.float32)
    bsc = 0.01 * jax.random.normal(kbs, (2 * A,), jnp.float32)

    params = {
        # conv1 weight as (ky, kx*Cin+ci, co) for the fused-tap matmuls (bf16)
        "w1": jnp.transpose(w1_oihw, (2, 3, 1, 0)).reshape(3, 3 * Cin, Cmid)
                 .astype(jnp.bfloat16),
        "b1": b1.reshape(1, Cmid),
        # fused loc|score 1x1 weight, lane-padded to Cpad (bf16)
        "wcat": jnp.pad(jnp.concatenate([wl, wsc], axis=1),
                        ((0, 0), (0, Cpad - 6 * A))).astype(jnp.bfloat16),
        "bcat": jnp.pad(jnp.concatenate([bl, bsc]), (0, Cpad - 6 * A)).reshape(1, Cpad),
    }
    sc2d = jnp.asarray(sc_np)
    of2d = jnp.asarray(of_np)
    mask2d = jnp.asarray(mask_np)

    loc_out, cls_out, rois = rpn_forward(x, params, sc2d, of2d, mask2d, A=A, Hblk=Hblk)
    jax.block_until_ready((loc_out, cls_out, rois))

    # Verify against the pure-f32 reference.
    loc_ref, cls_ref, rois_ref = rpn_reference(x, w1_oihw, b1, wl, bl, wsc, bsc, center, A)
    np.testing.assert_allclose(np.asarray(loc_out), np.asarray(loc_ref), rtol=5e-3, atol=5e-2)
    np.testing.assert_allclose(np.asarray(cls_out), np.asarray(cls_ref), rtol=5e-3, atol=5e-2)
    # rois are absolute image coordinates (O(1e2)); bf16 matmul operands -> looser abs tol.
    np.testing.assert_allclose(np.asarray(rois), np.asarray(rois_ref), rtol=2e-2, atol=5e-1)
    assert loc_out.shape == (N * H * W * A, 4)
    assert cls_out.shape == (N * H * W * A, 2)
    assert rois.shape == (N * H * W * A, 4)

    print("KERNEL_OK")
</pallas_src>

<mosaic_0001>
module attributes {stable_mosaic.version = 11 : i64} {
  func.func @kernel(%arg0: i32, %arg1: i32, %arg2: memref<1x1x112x32xbf16, #tpu.memory_space<vmem>>, %arg3: memref<3x96x32xbf16, #tpu.memory_space<vmem>>, %arg4: memref<1x32xf32, #tpu.memory_space<vmem>>, %arg5: memref<32x128xbf16, #tpu.memory_space<vmem>>, %arg6: memref<1x128xf32, #tpu.memory_space<vmem>>, %arg7: memref<64x128xf32, #tpu.memory_space<vmem>>, %arg8: memref<64x128xf32, #tpu.memory_space<vmem>>, %arg9: memref<1x128xf32, #tpu.memory_space<vmem>>, %arg10: memref<1x64x128xf32, #tpu.memory_space<vmem>>, %arg11: memref<1x64x128xf32, #tpu.memory_space<vmem>>, %arg12: memref<96x96xbf16, #tpu.memory_space<vmem>>) attributes {dimension_semantics = [#tpu.dimension_semantics<parallel>, #tpu.dimension_semantics<parallel>], iteration_bounds = array<i64: 1, 2>, scalar_prefetch = 0 : i64, scratch_operands = 1 : i64, tpu.core_type = #tpu.core_type<tc>, window_params = [{transform_indices = @transform_0, window_bounds = array<i64: 1, 1, 112, 32>}, {pipeline_mode = #tpu.pipeline_mode<synchronous>, transform_indices = @transform_1, window_bounds = array<i64: 3, 96, 32>}, {pipeline_mode = #tpu.pipeline_mode<synchronous>, transform_indices = @transform_2, window_bounds = array<i64: 1, 32>}, {pipeline_mode = #tpu.pipeline_mode<synchronous>, transform_indices = @transform_3, window_bounds = array<i64: 32, 128>}, {pipeline_mode = #tpu.pipeline_mode<synchronous>, transform_indices = @transform_4, window_bounds = array<i64: 1, 128>}, {transform_indices = @transform_5, window_bounds = array<i64: 64, 128>}, {transform_indices = @transform_6, window_bounds = array<i64: 64, 128>}, {pipeline_mode = #tpu.pipeline_mode<synchronous>, transform_indices = @transform_7, window_bounds = array<i64: 1, 128>}, {transform_indices = @transform_8, window_bounds = array<i64: 1, 64, 128>}, {transform_indices = @transform_9, window_bounds = array<i64: 1, 64, 128>}]} {
    %c0 = arith.constant 0 : index
    %c0_0 = arith.constant 0 : index
    %c0_1 = arith.constant 0 : index
    %c0_2 = arith.constant 0 : index
    %0 = vector.load %arg2[%c0, %c0_0, %c0_1, %c0_2] : memref<1x1x112x32xbf16, #tpu.memory_space<vmem>>, vector<1x1x112x32xbf16>
    %1 = vector.shape_cast %0 : vector<1x1x112x32xbf16> to vector<112x32xbf16>
    %2 = vector.extract_strided_slice %1 {offsets = [0, 0], sizes = [96, 32], strides = [1, 1]} : vector<112x32xbf16> to vector<96x32xbf16>
    %c0_3 = arith.constant 0 : index
    %c0_4 = arith.constant 0 : index
    %3 = vector.load %arg12[%c0_3, %c0_4] : memref<96x96xbf16, #tpu.memory_space<vmem>>, vector<96x32xbf16>
    tpu.vector_store %arg12[%c0_3, %c0_4], %2 {strides = array<i32>} : memref<96x96xbf16, #tpu.memory_space<vmem>>, vector<96x32xbf16>,
    %4 = vector.extract_strided_slice %1 {offsets = [1, 0], sizes = [96, 32], strides = [1, 1]} : vector<112x32xbf16> to vector<96x32xbf16>
    %c0_5 = arith.constant 0 : index
    %c32 = arith.constant 32 : index
    %5 = vector.load %arg12[%c0_5, %c32] : memref<96x96xbf16, #tpu.memory_space<vmem>>, vector<96x32xbf16>
    tpu.vector_store %arg12[%c0_5, %c32], %4 {strides = array<i32>} : memref<96x96xbf16, #tpu.memory_space<vmem>>, vector<96x32xbf16>,
    %6 = vector.extract_strided_slice %1 {offsets = [2, 0], sizes = [96, 32], strides = [1, 1]} : vector<112x32xbf16> to vector<96x32xbf16>
    %c0_6 = arith.constant 0 : index
    %c64 = arith.constant 64 : index
    %7 = vector.load %arg12[%c0_6, %c64] : memref<96x96xbf16, #tpu.memory_space<vmem>>, vector<96x32xbf16>
    tpu.vector_store %arg12[%c0_6, %c64], %6 {strides = array<i32>} : memref<96x96xbf16, #tpu.memory_space<vmem>>, vector<96x32xbf16>,
    %c0_7 = arith.constant 0 : index
    %c0_8 = arith.constant 0 : index
    %8 = vector.load %arg12[%c0_7, %c0_8] : memref<96x96xbf16, #tpu.memory_space<vmem>>, vector<64x96xbf16>
    %c0_9 = arith.constant 0 : index
    %c0_10 = arith.constant 0 : index
    %c0_11 = arith.constant 0 : index
    %9 = vector.load %arg3[%c0_9, %c0_10, %c0_11] : memref<3x96x32xbf16, #tpu.memory_space<vmem>>, vector<1x96x32xbf16>
    %10 = vector.shape_cast %9 : vector<1x96x32xbf16> to vector<96x32xbf16>
    %cst = arith.constant dense<0.000000e+00> : vector<64x32xf32>
    %11 = tpu.matmul %8, %10, %cst {dimension_numbers = #tpu.dot_dimension_numbers<[1], [0], [0], [1], [0, 0, 1, 1], [], []>} : vector<64x96xbf16>, vector<96x32xbf16>, vector<64x32xf32> -> vector<64x32xf32>
    %c16 = arith.constant 16 : index
    %c0_12 = arith.constant 0 : index
    %12 = vector.load %arg12[%c16, %c0_12] : memref<96x96xbf16, #tpu.memory_space<vmem>>, vector<64x96xbf16>
    %c1 = arith.constant 1 : index
    %c0_13 = arith.constant 0 : index
    %c0_14 = arith.constant 0 : index
    %13 = vector.load %arg3[%c1, %c0_13, %c0_14] : memref<3x96x32xbf16, #tpu.memory_space<vmem>>, vector<1x96x32xbf16>
    %14 = vector.shape_cast %13 : vector<1x96x32xbf16> to vector<96x32xbf16>
    %cst_15 = arith.constant dense<0.000000e+00> : vector<64x32xf32>
    %15 = tpu.matmul %12, %14, %cst_15 {dimension_numbers = #tpu.dot_dimension_numbers<[1], [0], [0], [1], [0, 0, 1, 1], [], []>} : vector<64x96xbf16>, vector<96x32xbf16>, vector<64x32xf32> -> vector<64x32xf32>
    %16 = arith.addf %11, %15 : vector<64x32xf32>
    %c32_16 = arith.constant 32 : index
    %c0_17 = arith.constant 0 : index
    %17 = vector.load %arg12[%c32_16, %c0_17] : memref<96x96xbf16, #tpu.memory_space<vmem>>, vector<64x96xbf16>
    %c2 = arith.constant 2 : index
    %c0_18 = arith.constant 0 : index
    %c0_19 = arith.constant 0 : index
    %18 = vector.load %arg3[%c2, %c0_18, %c0_19] : memref<3x96x32xbf16, #tpu.memory_space<vmem>>, vector<1x96x32xbf16>
    %19 = vector.shape_cast %18 : vector<1x96x32xbf16> to vector<96x32xbf16>
    %cst_20 = arith.constant dense<0.000000e+00> : vector<64x32xf32>
    %20 = tpu.matmul %17, %19, %cst_20 {dimension_numbers = #tpu.dot_dimension_numbers<[1], [0], [0], [1], [0, 0, 1, 1], [], []>} : vector<64x96xbf16>, vector<96x32xbf16>, vector<64x32xf32> -> vector<64x32xf32>
    %21 = arith.addf %16, %20 : vector<64x32xf32>
    %c0_21 = arith.constant 0 : index
    %c0_22 = arith.constant 0 : index
    %22 = vector.load %arg4[%c0_21, %c0_22] : memref<1x32xf32, #tpu.memory_space<vmem>>, vector<1x32xf32>
    %23 = vector.broadcast %22 : vector<1x32xf32> to vector<64x32xf32>
    %24 = arith.addf %21, %23 : vector<64x32xf32>
    %cst_23 = arith.constant 0.000000e+00 : f32
    %25 = vector.broadcast %cst_23 : f32 to vector<64x32xf32>
    %26 = arith.maximumf %24, %25 : vector<64x32xf32>
    %27 = arith.truncf %26 : vector<64x32xf32> to vector<64x32xbf16>
    %c0_24 = arith.constant 0 : index
    %c0_25 = arith.constant 0 : index
    %28 = vector.load %arg5[%c0_24, %c0_25] : memref<32x128xbf16, #tpu.memory_space<vmem>>, vector<32x128xbf16>
    %cst_26 = arith.constant dense<0.000000e+00> : vector<64x128xf32>
    %29 = tpu.matmul %27, %28, %cst_26 {dimension_numbers = #tpu.dot_dimension_numbers<[1], [0], [0], [1], [0, 0, 1, 1], [], []>} : vector<64x32xbf16>, vector<32x128xbf16>, vector<64x128xf32> -> vector<64x128xf32>
    %c0_27 = arith.constant 0 : index
    %c0_28 = arith.constant 0 : index
    %30 = vector.load %arg6[%c0_27, %c0_28] : memref<1x128xf32, #tpu.memory_space<vmem>>, vector<1x128xf32>
    %31 = vector.broadcast %30 : vector<1x128xf32> to vector<64x128xf32>
    %32 = arith.addf %29, %31 : vector<64x128xf32>
    %c0_29 = arith.constant 0 : index
    %c0_30 = arith.constant 0 : index
    %c0_31 = arith.constant 0 : index
    %33 = vector.load %arg10[%c0_29, %c0_30, %c0_31] : memref<1x64x128xf32, #tpu.memory_space<vmem>>, vector<1x64x128xf32>
    %34 = vector.shape_cast %33 : vector<1x64x128xf32> to vector<64x128xf32>
    %35 = vector.shape_cast %32 : vector<64x128xf32> to vector<1x64x128xf32>
    tpu.vector_store %arg10[%c0_29, %c0_30, %c0_31], %35 {strides = array<i32>} : memref<1x64x128xf32, #tpu.memory_space<vmem>>, vector<1x64x128xf32>,
    %c0_32 = arith.constant 0 : index
    %c0_33 = arith.constant 0 : index
    %36 = vector.load %arg9[%c0_32, %c0_33] : memref<1x128xf32, #tpu.memory_space<vmem>>, vector<1x128xf32>
    %cst_34 = arith.constant 5.000000e-01 : f32
    %37 = vector.broadcast %cst_34 : f32 to vector<1x128xf32>
    %38 = arith.cmpf ogt, %36, %37 : vector<1x128xf32>
    %39 = math.exp %32 : vector<64x128xf32>
    %40 = vector.shape_cast %38 : vector<1x128xi1> to vector<1x128xi1>
    %41 = vector.broadcast %40 : vector<1x128xi1> to vector<64x128xi1>
    %42 = arith.select %41, %32, %39 : vector<64x128xi1>, vector<64x128xf32>
    %c0_35 = arith.constant 0 : index
    %c0_36 = arith.constant 0 : index
    %43 = vector.load %arg7[%c0_35, %c0_36] : memref<64x128xf32, #tpu.memory_space<vmem>>, vector<64x128xf32>
    %44 = arith.mulf %42, %43 : vector<64x128xf32>
    %c0_37 = arith.constant 0 : index
    %c0_38 = arith.constant 0 : index
    %45 = vector.load %arg8[%c0_37, %c0_38] : memref<64x128xf32, #tpu.memory_space<vmem>>, vector<64x128xf32>
    %46 = arith.addf %44, %45 : vector<64x128xf32>
    %c0_39 = arith.constant 0 : index
    %c0_40 = arith.constant 0 : index
    %c0_41 = arith.constant 0 : index
    %47 = vector.load %arg11[%c0_39, %c0_40, %c0_41] : memref<1x64x128xf32, #tpu.memory_space<vmem>>, vector<1x64x128xf32>
    %48 = vector.shape_cast %47 : vector<1x64x128xf32> to vector<64x128xf32>
    %49 = vector.shape_cast %46 : vector<64x128xf32> to vector<1x64x128xf32>
    tpu.vector_store %arg11[%c0_39, %c0_40, %c0_41], %49 {strides = array<i32>} : memref<1x64x128xf32, #tpu.memory_space<vmem>>, vector<1x64x128xf32>,
    return
  }
  func.func @transform_0(%arg0: i32, %arg1: i32) -> (i32, i32, i32, i32) {
    %c0_i32 = arith.constant 0 : i32
    %c0_i32_0 = arith.constant 0 : i32
    %c0_i32_1 = arith.constant 0 : i32
    return %arg0, %arg1, %c0_i32, %c0_i32_0 : i32, i32, i32, i32
  }
  func.func @transform_1(%arg0: i32, %arg1: i32) -> (i32, i32, i32) {
    %c0_i32 = arith.constant 0 : i32
    %c0_i32_0 = arith.constant 0 : i32
    %c0_i32_1 = arith.constant 0 : i32
    %c0_i32_2 = arith.constant 0 : i32
    return %c0_i32, %c0_i32_0, %c0_i32_1 : i32, i32, i32
  }
  func.func @transform_2(%arg0: i32, %arg1: i32) -> (i32, i32) {
    %c0_i32 = arith.constant 0 : i32
    %c0_i32_0 = arith.constant 0 : i32
    %c0_i32_1 = arith.constant 0 : i32
    return %c0_i32, %c0_i32_0 : i32, i32
  }
  func.func @transform_3(%arg0: i32, %arg1: i32) -> (i32, i32) {
    %c0_i32 = arith.constant 0 : i32
    %c0_i32_0 = arith.constant 0 : i32
    %c0_i32_1 = arith.constant 0 : i32
    return %c0_i32, %c0_i32_0 : i32, i32
  }
  func.func @transform_4(%arg0: i32, %arg1: i32) -> (i32, i32) {
    %c0_i32 = arith.constant 0 : i32
    %c0_i32_0 = arith.constant 0 : i32
    %c0_i32_1 = arith.constant 0 : i32
    return %c0_i32, %c0_i32_0 : i32, i32
  }
  func.func @transform_5(%arg0: i32, %arg1: i32) -> (i32, i32) {
    %c0_i32 = arith.constant 0 : i32
    %c0_i32_0 = arith.constant 0 : i32
    return %arg1, %c0_i32 : i32, i32
  }
  func.func @transform_6(%arg0: i32, %arg1: i32) -> (i32, i32) {
    %c0_i32 = arith.constant 0 : i32
    %c0_i32_0 = arith.constant 0 : i32
    return %arg1, %c0_i32 : i32, i32
  }
  func.func @transform_7(%arg0: i32, %arg1: i32) -> (i32, i32) {
    %c0_i32 = arith.constant 0 : i32
    %c0_i32_0 = arith.constant 0 : i32
    %c0_i32_1 = arith.constant 0 : i32
    return %c0_i32, %c0_i32_0 : i32, i32
  }
  func.func @transform_8(%arg0: i32, %arg1: i32) -> (i32, i32, i32) {
    %c0_i32 = arith.constant 0 : i32
    %c0_i32_0 = arith.constant 0 : i32
    return %arg0, %arg1, %c0_i32 : i32, i32, i32
  }
  func.func @transform_9(%arg0: i32, %arg1: i32) -> (i32, i32, i32) {
    %c0_i32 = arith.constant 0 : i32
    %c0_i32_0 = arith.constant 0 : i32
    return %arg0, %arg1, %c0_i32 : i32, i32, i32
  }
}

</mosaic_0001>

<llo_original>
// kernel: tpu_custom_call.1
$region0: #{tpu_custom_call.1}
  #allocation0 [shape = 'u32[]', space=smem, size = 0x4, offset = 0x4, fixed_abs, tag = 'smem constant byte address 0x4 - core index']
  #allocation1 [shape = 'u32[144,128]{1,0:T(1,128)}', space=vmem, size = 0x12000, scoped, tag = 'internal scratch']
  #allocation2 [shape = 'bf16[96,96]{1,0:T(16,128)(2,1)}', space=vmem, size = 0x6000, scoped, tag = 'scratch operand']
  %s0 = inlined_call_operand.vmem [shape: bf16[1,2,112,32], index: 0, kind: input, shape index: {}]
  %s1 = inlined_call_operand.vmem [shape: bf16[3,96,32], index: 1, kind: input, shape index: {}]
  %s2 = inlined_call_operand.vmem [shape: f32[1,32], index: 2, kind: input, shape index: {}]
  %s3 = inlined_call_operand.vmem [shape: bf16[32,128], index: 3, kind: input, shape index: {}]
  %s4 = inlined_call_operand.vmem [shape: f32[1,128], index: 4, kind: input, shape index: {}]
  %s5 = inlined_call_operand.vmem [shape: f32[128,128], index: 5, kind: input, shape index: {}]
  %s6 = inlined_call_operand.vmem [shape: f32[128,128], index: 6, kind: input, shape index: {}]
  %s7 = inlined_call_operand.vmem [shape: f32[1,128], index: 7, kind: input, shape index: {}]
  %s8 = inlined_call_operand.hbm [shape: f32[1,128,128], index: 8, kind: output, shape index: {0}]
  %s9 = inlined_call_operand.hbm [shape: f32[1,128,128], index: 9, kind: output, shape index: {1}]
  %10 = xla_tuple %s8, %s9
  %s11 = sld [smem:[#allocation0]]
  $region73: #{tpu_custom_call.1} parent=0
    _
  %s13 = ssub.s32 1, %s11
  %s14 = scalar_select 0, %s13, %s11
  $region1: #{tpu_custom_call.1} parent=0
    #allocation3 [shape = 'u8[65536]{0}', space=vmem, size = 0x10000, scoped, tag = 'output window, operand 0']
    #allocation4 [shape = 's32[2]{0}', space=sflag, size = 0x8, scoped, tag = 'scoped memory for tpu_custom_call.1']
    #allocation5 [shape = 'u8[65536]{0}', space=vmem, size = 0x10000, scoped, tag = 'output window, operand 1']
    #allocation6 [shape = 's32[2]{0}', space=sflag, size = 0x8, scoped, tag = 'scoped memory for tpu_custom_call.1']
    %15 = vsyncpa [#allocation4], 0
    %s16 = scalar_lea.sflag [#allocation4], 1
    %17 = vsyncpa %s16, 0
    %18 = vsyncpa [#allocation6], 0
    %s19 = scalar_lea.sflag [#allocation6], 1
    %20 = vsyncpa %s19, 0
    loop: start=0, step=1, limit=4
    $region2: #{tpu_custom_call.1} parent=1 // loop_pre_header
      _
    $region3: #{tpu_custom_call.1} parent=1 // loop_header
      %s22 = sphi 0, %s26
      %p23 = scmp.ge.s32.totalorder %s22, 4
      %s29 = sphi 0, %s41
      %s30 = sphi 0, %s37
      %s31 = sphi 0, %s29
      %s32 = sphi 0, %s30
      %s33 = sphi 0, %s31
      %s34 = sphi 0, %s32
      %s46 = sphi 0, %s48
      %s49 = sphi 0, %s46
      %s50 = sphi 0, %s49
      %s66 = sphi 0, %s50
      %s70 = sphi 0, %s70
      %s72 = sphi 0, %s70
      %s73 = sphi 0, %s72
      %s87 = sphi 0, %s73
      %s91 = sphi 0, %s91
      %s93 = sphi 0, %s91
      %s94 = sphi 0, %s93
      %s108 = sphi 0, %s94
      %s112 = sphi 0, %s112
      %s114 = sphi 0, %s112
      %s115 = sphi 0, %s114
      %s129 = sphi 0, %s115
      %s133 = sphi 0, %s133
      %s135 = sphi 0, %s133
      %s136 = sphi 0, %s135
      %s150 = sphi 0, %s136
      %s156 = sphi 0, %s158
      %s159 = sphi 0, %s156
      %s160 = sphi 0, %s159
      %s176 = sphi 0, %s160
      %s182 = sphi 0, %s184
      %s185 = sphi 0, %s182
      %s186 = sphi 0, %s185
      %s202 = sphi 0, %s186
      %s206 = sphi 0, %s206
      %s208 = sphi 0, %s206
      %s209 = sphi 0, %s208
      %s223 = sphi 0, %s209
      %s231 = sphi 0, %s233
      %s234 = sphi 0, %s231
      %s235 = sphi 0, %s234
      %s251 = sphi 0, %s235
      %s259 = sphi 0, %s261
      %s262 = sphi 0, %s259
      %s263 = sphi 0, %s262
      %s279 = sphi 0, %s263
    $region4: #{tpu_custom_call.1} parent=1 // loop_header_branch
      %25 = sbr.rel (%p23) target = $region8
    $region5: #{tpu_custom_call.1} parent=1 // loop_body
      %s27 = ssub.s32 %s22, 1
      %s28 = ssub.s32 %s22, 2
      %s35 = sadd.s32 1, %s30
      %p36 = scmp.ge.s32.totalorder %s35, 2
      %s37 = scalar_select %p36, 0, %s35
      %s38 = sadd.s32 1, %s29
      %s39 = scalar_select %p36, %s38, %s29
      %p40 = scmp.ge.s32.totalorder %s39, 1
      %s41 = scalar_select %p40, 0, %s39
      %s42 = ssub.s32 %s29, %s41
      %s43 = ssub.s32 %s30, %s37
      %s44 = sor.u32 %s42, %s43
      %p45 = scmp.eq.s32.totalorder %s44, 0
      %s47 = sadd.s32 %s46, 1
      %s48 = scalar_select %p45, %s46, %s47
      %p51 = pneg %p45
      %p52 = scmp.eq.s32.totalorder %s22, 1
      %p53 = por %p51, %p52
      %p54 = scmp.ne.s32.totalorder %s46, %s49
      %p55 = scmp.eq.s32.totalorder %s22, 0
      %p56 = por %p54, %p55
      %p57 = scmp.ne.s32.totalorder %s46, %s49
      %p58 = scmp.eq.s32.totalorder %s27, 1
      %p59 = por %p57, %p58
      %p60 = scmp.ne.s32.totalorder %s49, %s50
      %p61 = scmp.eq.s32.totalorder %s27, 0
      %p62 = por %p60, %p61
      %p63 = scmp.ne.s32.totalorder %s49, %s50
      %p64 = scmp.eq.s32.totalorder %s28, 1
      %p65 = por %p63, %p64
      %p67 = scmp.ne.s32.totalorder %s50, %s66
      %p68 = scmp.eq.s32.totalorder %s28, 0
      %p69 = por %p67, %p68
      %s71 = sadd.s32 %s70, 1
      %p74 = scmp.eq.s32.totalorder %s22, 1
      %p75 = scmp.ne.s32.totalorder %s70, %s72
      %p76 = scmp.eq.s32.totalorder %s22, 0
      %p77 = por %p75, %p76
      %p78 = scmp.ne.s32.totalorder %s70, %s72
      %p79 = scmp.eq.s32.totalorder %s27, 1
      %p80 = por %p78, %p79
      %p81 = scmp.ne.s32.totalorder %s72, %s73
      %p82 = scmp.eq.s32.totalorder %s27, 0
      %p83 = por %p81, %p82
      %p84 = scmp.ne.s32.totalorder %s72, %s73
      %p85 = scmp.eq.s32.totalorder %s28, 1
      %p86 = por %p84, %p85
      %p88 = scmp.ne.s32.totalorder %s73, %s87
      %p89 = scmp.eq.s32.totalorder %s28, 0
      %p90 = por %p88, %p89
      %s92 = sadd.s32 %s91, 1
      %p95 = scmp.eq.s32.totalorder %s22, 1
      %p96 = scmp.ne.s32.totalorder %s91, %s93
      %p97 = scmp.eq.s32.totalorder %s22, 0
      %p98 = por %p96, %p97
      %p99 = scmp.ne.s32.totalorder %s91, %s93
      %p100 = scmp.eq.s32.totalorder %s27, 1
      %p101 = por %p99, %p100
      %p102 = scmp.ne.s32.totalorder %s93, %s94
      %p103 = scmp.eq.s32.totalorder %s27, 0
      %p104 = por %p102, %p103
      %p105 = scmp.ne.s32.totalorder %s93, %s94
      %p106 = scmp.eq.s32.totalorder %s28, 1
      %p107 = por %p105, %p106
      %p109 = scmp.ne.s32.totalorder %s94, %s108
      %p110 = scmp.eq.s32.totalorder %s28, 0
      %p111 = por %p109, %p110
      %s113 = sadd.s32 %s112, 1
      %p116 = scmp.eq.s32.totalorder %s22, 1
      %p117 = scmp.ne.s32.totalorder %s112, %s114
      %p118 = scmp.eq.s32.totalorder %s22, 0
      %p119 = por %p117, %p118
      %p120 = scmp.ne.s32.totalorder %s112, %s114
      %p121 = scmp.eq.s32.totalorder %s27, 1
      %p122 = por %p120, %p121
      %p123 = scmp.ne.s32.totalorder %s114, %s115
      %p124 = scmp.eq.s32.totalorder %s27, 0
      %p125 = por %p123, %p124
      %p126 = scmp.ne.s32.totalorder %s114, %s115
      %p127 = scmp.eq.s32.totalorder %s28, 1
      %p128 = por %p126, %p127
      %p130 = scmp.ne.s32.totalorder %s115, %s129
      %p131 = scmp.eq.s32.totalorder %s28, 0
      %p132 = por %p130, %p131
      %s134 = sadd.s32 %s133, 1
      %p137 = scmp.eq.s32.totalorder %s22, 1
      %p138 = scmp.ne.s32.totalorder %s133, %s135
      %p139 = scmp.eq.s32.totalorder %s22, 0
      %p140 = por %p138, %p139
      %p141 = scmp.ne.s32.totalorder %s133, %s135
      %p142 = scmp.eq.s32.totalorder %s27, 1
      %p143 = por %p141, %p142
      %p144 = scmp.ne.s32.totalorder %s135, %s136
      %p145 = scmp.eq.s32.totalorder %s27, 0
      %p146 = por %p144, %p145
      %p147 = scmp.ne.s32.totalorder %s135, %s136
      %p148 = scmp.eq.s32.totalorder %s28, 1
      %p149 = por %p147, %p148
      %p151 = scmp.ne.s32.totalorder %s136, %s150
      %p152 = scmp.eq.s32.totalorder %s28, 0
      %p153 = por %p151, %p152
      %s154 = ssub.s32 %s30, %s37
      %p155 = scmp.eq.s32.totalorder %s154, 0
      %s157 = sadd.s32 %s156, 1
      %s158 = scalar_select %p155, %s156, %s157
      %p161 = pneg %p155
      %p162 = scmp.eq.s32.totalorder %s22, 1
      %p163 = por %p161, %p162
      %p164 = scmp.ne.s32.totalorder %s156, %s159
      %p165 = scmp.eq.s32.totalorder %s22, 0
      %p166 = por %p164, %p165
      %p167 = scmp.ne.s32.totalorder %s156, %s159
      %p168 = scmp.eq.s32.totalorder %s27, 1
      %p169 = por %p167, %p168
      %p170 = scmp.ne.s32.totalorder %s159, %s160
      %p171 = scmp.eq.s32.totalorder %s27, 0
      %p172 = por %p170, %p171
      %p173 = scmp.ne.s32.totalorder %s159, %s160
      %p174 = scmp.eq.s32.totalorder %s28, 1
      %p175 = por %p173, %p174
      %p177 = scmp.ne.s32.totalorder %s160, %s176
      %p178 = scmp.eq.s32.totalorder %s28, 0
      %p179 = por %p177, %p178
      %s180 = ssub.s32 %s30, %s37
      %p181 = scmp.eq.s32.totalorder %s180, 0
      %s183 = sadd.s32 %s182, 1
      %s184 = scalar_select %p181, %s182, %s183
      %p187 = pneg %p181
      %p188 = scmp.eq.s32.totalorder %s22, 1
      %p189 = por %p187, %p188
      %p190 = scmp.ne.s32.totalorder %s182, %s185
      %p191 = scmp.eq.s32.totalorder %s22, 0
      %p192 = por %p190, %p191
      %p193 = scmp.ne.s32.totalorder %s182, %s185
      %p194 = scmp.eq.s32.totalorder %s27, 1
      %p195 = por %p193, %p194
      %p196 = scmp.ne.s32.totalorder %s185, %s186
      %p197 = scmp.eq.s32.totalorder %s27, 0
      %p198 = por %p196, %p197
      %p199 = scmp.ne.s32.totalorder %s185, %s186
      %p200 = scmp.eq.s32.totalorder %s28, 1
      %p201 = por %p199, %p200
      %p203 = scmp.ne.s32.totalorder %s186, %s202
      %p204 = scmp.eq.s32.totalorder %s28, 0
      %p205 = por %p203, %p204
      %s207 = sadd.s32 %s206, 1
      %p210 = scmp.eq.s32.totalorder %s22, 1
      %p211 = scmp.ne.s32.totalorder %s206, %s208
      %p212 = scmp.eq.s32.totalorder %s22, 0
      %p213 = por %p211, %p212
      %p214 = scmp.ne.s32.totalorder %s206, %s208
      %p215 = scmp.eq.s32.totalorder %s27, 1
      %p216 = por %p214, %p215
      %p217 = scmp.ne.s32.totalorder %s208, %s209
      %p218 = scmp.eq.s32.totalorder %s27, 0
      %p219 = por %p217, %p218
      %p220 = scmp.ne.s32.totalorder %s208, %s209
      %p221 = scmp.eq.s32.totalorder %s28, 1
      %p222 = por %p220, %p221
      %p224 = scmp.ne.s32.totalorder %s209, %s223
      %p225 = scmp.eq.s32.totalorder %s28, 0
      %p226 = por %p224, %p225
      %s227 = ssub.s32 %s29, %s41
      %s228 = ssub.s32 %s30, %s37
      %s229 = sor.u32 %s227, %s228
      %p230 = scmp.eq.s32.totalorder %s229, 0
      %s232 = sadd.s32 %s231, 1
      %s233 = scalar_select %p230, %s231, %s232
      %p236 = pneg %p230
      %p237 = scmp.eq.s32.totalorder %s22, 1
      %p238 = por %p236, %p237
      %p239 = scmp.ne.s32.totalorder %s231, %s234
      %p240 = scmp.eq.s32.totalorder %s22, 0
      %p241 = por %p239, %p240
      %p242 = scmp.ne.s32.totalorder %s231, %s234
      %p243 = scmp.eq.s32.totalorder %s27, 1
      %p244 = por %p242, %p243
      %p245 = scmp.ne.s32.totalorder %s234, %s235
      %p246 = scmp.eq.s32.totalorder %s27, 0
      %p247 = por %p245, %p246
      %p248 = scmp.ne.s32.totalorder %s234, %s235
      %p249 = scmp.eq.s32.totalorder %s28, 1
      %p250 = por %p248, %p249
      %p252 = scmp.ne.s32.totalorder %s235, %s251
      %p253 = scmp.eq.s32.totalorder %s28, 0
      %p254 = por %p252, %p253
      %s255 = ssub.s32 %s29, %s41
      %s256 = ssub.s32 %s30, %s37
      %s257 = sor.u32 %s255, %s256
      %p258 = scmp.eq.s32.totalorder %s257, 0
      %s260 = sadd.s32 %s259, 1
      %s261 = scalar_select %p258, %s259, %s260
      %p264 = pneg %p258
      %p265 = scmp.eq.s32.totalorder %s22, 1
      %p266 = por %p264, %p265
      %p267 = scmp.ne.s32.totalorder %s259, %s262
      %p268 = scmp.eq.s32.totalorder %s22, 0
      %p269 = por %p267, %p268
      %p270 = scmp.ne.s32.totalorder %s259, %s262
      %p271 = scmp.eq.s32.totalorder %s27, 1
      %p272 = por %p270, %p271
      %p273 = scmp.ne.s32.totalorder %s262, %s263
      %p274 = scmp.eq.s32.totalorder %s27, 0
      %p275 = por %p273, %p274
      %p276 = scmp.ne.s32.totalorder %s262, %s263
      %p277 = scmp.eq.s32.totalorder %s28, 1
      %p278 = por %p276, %p277
      %p280 = scmp.ne.s32.totalorder %s263, %s279
      %p281 = scmp.eq.s32.totalorder %s28, 0
      %p282 = por %p280, %p281
      %p283 = scmp.le.s32.totalorder 1, %s22
      %p284 = scmp.lt.s32.totalorder %s22, 3
      %p285 = pnand %p283, %p284
      %p286 = pneg %p285
      // Predicated region
      $region9: #{tpu_custom_call.1} parent=5 // pred_check
        _
      $region10: #{tpu_custom_call.1} parent=5 // pred_check_branch
        %288 = sbr.rel (%p285) target = $region12
      $region11: #{tpu_custom_call.1} parent=5 // pred_region
        %s289 = ssub.s32 %s22, 1
        // Predicated region
        $region13: #{tpu_custom_call.1} parent=11 // pred_check
          %p290 = pneg %p83
        $region14: #{tpu_custom_call.1} parent=11 // pred_check_branch
          %292 = sbr.rel (%p290) target = $region16
        $region15: #{tpu_custom_call.1} parent=11 // pred_region
          _
        $region16: #{tpu_custom_call.1} parent=11 // pred_fallthru
          _
        // Predicated region
        $region17: #{tpu_custom_call.1} parent=11 // pred_check
          %p293 = pneg %p104
        $region18: #{tpu_custom_call.1} parent=11 // pred_check_branch
          %295 = sbr.rel (%p293) target = $region20
        $region19: #{tpu_custom_call.1} parent=11 // pred_region
          _
        $region20: #{tpu_custom_call.1} parent=11 // pred_fallthru
          _
        // Predicated region
        $region21: #{tpu_custom_call.1} parent=11 // pred_check
          %p296 = pneg %p125
        $region22: #{tpu_custom_call.1} parent=11 // pred_check_branch
          %298 = sbr.rel (%p296) target = $region24
        $region23: #{tpu_custom_call.1} parent=11 // pred_region
          _
        $region24: #{tpu_custom_call.1} parent=11 // pred_fallthru
          _
        // Predicated region
        $region25: #{tpu_custom_call.1} parent=11 // pred_check
          %p299 = pneg %p146
        $region26: #{tpu_custom_call.1} parent=11 // pred_check_branch
          %301 = sbr.rel (%p299) target = $region28
        $region27: #{tpu_custom_call.1} parent=11 // pred_region
          _
        $region28: #{tpu_custom_call.1} parent=11 // pred_fallthru
          _
        // Predicated region
        $region29: #{tpu_custom_call.1} parent=11 // pred_check
          %p302 = pneg %p219
        $region30: #{tpu_custom_call.1} parent=11 // pred_check_branch
          %304 = sbr.rel (%p302) target = $region32
        $region31: #{tpu_custom_call.1} parent=11 // pred_region
          _
        $region32: #{tpu_custom_call.1} parent=11 // pred_fallthru
          _
      $region12: #{tpu_custom_call.1} parent=5 // pred_fallthru
        _
      %p305 = scmp.lt.s32.totalorder %s22, 2
      // Predicated region
      $region33: #{tpu_custom_call.1} parent=5 // pred_check
        %p306 = pneg %p305
      $region34: #{tpu_custom_call.1} parent=5 // pred_check_branch
        %308 = sbr.rel (%p306) target = $region36
      $region35: #{tpu_custom_call.1} parent=5 // pred_region
        // Predicated region
        $region37: #{tpu_custom_call.1} parent=35 // pred_check
          %p309 = pneg %p56
        $region38: #{tpu_custom_call.1} parent=35 // pred_check_branch
          %311 = sbr.rel (%p309) target = $region40
        $region39: #{tpu_custom_call.1} parent=35 // pred_region
          %p312 = scmp.lt.s32.totalorder %s29, 0
          %s313 = scalar_select %p312, %s29, 0
          %p314 = scmp.lt.s32.totalorder %s30, 1
          %s315 = scalar_select %p314, %s30, 1
          %s316 = smul.addr %s315, 14
          %s317 = smul.addr %s313, 28
          %s318 = sadd.s32 %s316, %s317
          %s319 = smul.addr %s318, 4
          %s320 = scalar_lea.vmem %s0, %s319
        $region40: #{tpu_custom_call.1} parent=35 // pred_fallthru
          _
        // Predicated region
        $region41: #{tpu_custom_call.1} parent=35 // pred_check
          %p321 = pneg %p166
        $region42: #{tpu_custom_call.1} parent=35 // pred_check_branch
          %323 = sbr.rel (%p321) target = $region44
        $region43: #{tpu_custom_call.1} parent=35 // pred_region
          %s324 = smul.u32 8, %s30
          %p325 = scmp.lt.s32.totalorder %s324, 15
          %s326 = scalar_select %p325, %s324, 15
          %s327 = smul.addr %s326, 8
          %s328 = scalar_lea.vmem %s5, %s327
          %s329 = smul.u32 8, %s30
        $region44: #{tpu_custom_call.1} parent=35 // pred_fallthru
          _
        // Predicated region
        $region45: #{tpu_custom_call.1} parent=35 // pred_check
          %p330 = pneg %p192
        $region46: #{tpu_custom_call.1} parent=35 // pred_check_branch
          %332 = sbr.rel (%p330) target = $region48
        $region47: #{tpu_custom_call.1} parent=35 // pred_region
          %s333 = smul.u32 8, %s30
          %p334 = scmp.lt.s32.totalorder %s333, 15
          %s335 = scalar_select %p334, %s333, 15
          %s336 = smul.addr %s335, 8
          %s337 = scalar_lea.vmem %s6, %s336
          %s338 = smul.u32 8, %s30
        $region48: #{tpu_custom_call.1} parent=35 // pred_fallthru
          _
      $region36: #{tpu_custom_call.1} parent=5 // pred_fallthru
        _
      %p339 = scmp.le.s32.totalorder 1, %s22
      %p340 = scmp.lt.s32.totalorder %s22, 3
      %p341 = pnand %p339, %p340
      %p342 = pneg %p341
      // Predicated region
      $region49: #{tpu_custom_call.1} parent=5 // pred_check
        _
      $region50: #{tpu_custom_call.1} parent=5 // pred_check_branch
        %344 = sbr.rel (%p341) target = $region52
      $region51: #{tpu_custom_call.1} parent=5 // pred_region
        %s345 = ssub.s32 %s22, 1
        %p346 = scmp.lt.s32.totalorder %s31, 0
        %s347 = scalar_select %p346, %s31, 0
        %p348 = scmp.lt.s32.totalorder %s32, 1
        %s349 = scalar_select %p348, %s32, 1
        %s350 = smul.addr %s349, 14
        %s351 = smul.addr %s347, 28
        %s352 = sadd.s32 %s350, %s351
        %s353 = smul.addr %s352, 4
        %s354 = scalar_lea.vmem %s0, %s353
        %p355 = pneg %p62
        %p356 = pneg %p59
        %p357 = pneg %p83
        %p358 = pneg %p80
        %p359 = pneg %p104
        %p360 = pneg %p101
        %p361 = pneg %p125
        %p362 = pneg %p122
        %p363 = pneg %p146
        %p364 = pneg %p143
        %s365 = smul.u32 8, %s32
        %p366 = scmp.lt.s32.totalorder %s365, 15
        %s367 = scalar_select %p366, %s365, 15
        %s368 = smul.addr %s367, 8
        %s369 = scalar_lea.vmem %s5, %s368
        %p370 = pneg %p172
        %p371 = pneg %p169
        %s372 = smul.u32 8, %s32
        %p373 = scmp.lt.s32.totalorder %s372, 15
        %s374 = scalar_select %p373, %s372, 15
        %s375 = smul.addr %s374, 8
        %s376 = scalar_lea.vmem %s6, %s375
        %p377 = pneg %p198
        %p378 = pneg %p195
        %p379 = pneg %p219
        %p380 = pneg %p216
        %p381 = pneg %p247
        %p382 = pneg %p244
        %s383 = sand.u32 %s234, 1
        %s384 = scalar_lea.sflag [#allocation4], %s383
        %s385 = sand.u32 %s234, 1
        %s386 = smul.addr %s385, 64
        %s387 = scalar_lea.vmem [#allocation3], %s386
        %p388 = pneg %p275
        %p389 = pneg %p272
        %s390 = sand.u32 %s262, 1
        %s391 = scalar_lea.sflag [#allocation6], %s390
        %s392 = sand.u32 %s262, 1
        %s393 = smul.addr %s392, 64
        %s394 = scalar_lea.vmem [#allocation5], %s393
        %p395 = scmp.lt.s32.totalorder %s31, 0
        %s396 = scalar_select %p395, %s31, 0
        %p397 = scmp.lt.s32.totalorder %s32, 1
        %s398 = scalar_select %p397, %s32, 1
        %s399 = smul.addr %s398, 14
        %s400 = smul.addr %s396, 28
        %s401 = sadd.s32 %s399, %s400
        %s402 = smul.addr %s401, 4
        %s403 = scalar_lea.vmem %s0, %s402
        %s404 = smul.u32 8, %s32
        %p405 = scmp.lt.s32.totalorder %s404, 15
        %s406 = scalar_select %p405, %s404, 15
        %s407 = smul.addr %s406, 8
        %s408 = scalar_lea.vmem %s5, %s407
        %s409 = smul.u32 8, %s32
        %s410 = smul.u32 8, %s32
        %p411 = scmp.lt.s32.totalorder %s410, 15
        %s412 = scalar_select %p411, %s410, 15
        %s413 = smul.addr %s412, 8
        %s414 = scalar_lea.vmem %s6, %s413
        %s415 = smul.u32 8, %s32
        %s416 = smul.u32 8, %s32
        %s417 = smul.u32 8, %s32
        %v419 = vld [vmem:[%s403] sm:$0xf]
        %v420 = vld [vmem:[%s403 + $0x4] sm:$0xf]
        %v421 = vld [vmem:[%s403 + $0x8] sm:$0xf]
        %v422 = vld [vmem:[%s403 + $0xc] sm:$0xf]
        %v423 = vld [vmem:[%s403 + $0x10] sm:$0xf]
        %v424 = vld [vmem:[%s403 + $0x14] sm:$0xf]
        %v425 = vld [vmem:[%s403 + $0x18] sm:$0xf]
        %v426 = vld [vmem:[%s403 + $0x1c] sm:$0xf]
        %v427 = vld [vmem:[%s403 + $0x20] sm:$0xf]
        %v428 = vld [vmem:[%s403 + $0x24] sm:$0xf]
        %v429 = vld [vmem:[%s403 + $0x28] sm:$0xf]
        %v430 = vld [vmem:[%s403 + $0x2c] sm:$0xf]
        %v431 = vld [vmem:[%s403 + $0x30] sm:$0xf]
        %v444 = vunpack.c.l.b16 %v419
        %v445 = vunpack.c.l.b16 %v420
        %v446 = vunpack.c.l.b16 %v421
        %v447 = vunpack.c.l.b16 %v422
        %v448 = vunpack.c.l.b16 %v423
        %v449 = vunpack.c.l.b16 %v424
        %v450 = vunpack.c.l.b16 %v425
        %v451 = vunpack.c.l.b16 %v426
        %v452 = vunpack.c.l.b16 %v427
        %v453 = vunpack.c.l.b16 %v428
        %v454 = vunpack.c.l.b16 %v429
        %v455 = vunpack.c.l.b16 %v430
        %v456 = vpack.c.b16 %v445, %v444
        %v457 = vpack.c.b16 %v447, %v446
        %v458 = vpack.c.b16 %v449, %v448
        %v459 = vpack.c.b16 %v451, %v450
        %v460 = vpack.c.b16 %v453, %v452
        %v461 = vpack.c.b16 %v455, %v454
        %vm468 = vcmask 261120
        %469 = vst.msk [vmem:[#allocation2] sm:$0xff] %vm468, %v456
        %470 = vst.msk [vmem:[#allocation2 + $0x8] sm:$0xff] %vm468, %v457
        %471 = vst.msk [vmem:[#allocation2 + $0x10] sm:$0xff] %vm468, %v458
        %472 = vst.msk [vmem:[#allocation2 + $0x18] sm:$0xff] %vm468, %v459
        %473 = vst.msk [vmem:[#allocation2 + $0x20] sm:$0xff] %vm468, %v460
        %474 = vst.msk [vmem:[#allocation2 + $0x28] sm:$0xff] %vm468, %v461
        %v476 = vunpack.c.l.b16 %v431
        %v477 = vpack.c.b16 %v476, %v476
        %vm478 = vsmask.f32 7424
        %v480 = vshrl.u32 %v456, 16
        %v482 = vshll.u32 %v456, 16
        %v484 = vrot.slane %v482, 1
        %v485 = vor.u32 %v480, %v484
        %v487 = vshll.u32 %v457, 16
        %v489 = vrot.slane %v487, 1
        %v490 = vsel %vm478, %v485, %v489
        %v491 = vshrl.u32 %v457, 16
        %v493 = vor.u32 %v491, %v489
        %v495 = vshll.u32 %v458, 16
        %v497 = vrot.slane %v495, 1
        %v498 = vsel %vm478, %v493, %v497
        %v499 = vshrl.u32 %v458, 16
        %v501 = vor.u32 %v499, %v497
        %v503 = vshll.u32 %v459, 16
        %v505 = vrot.slane %v503, 1
        %v506 = vsel %vm478, %v501, %v505
        %v507 = vshrl.u32 %v459, 16
        %v509 = vor.u32 %v507, %v505
        %v511 = vshll.u32 %v460, 16
        %v513 = vrot.slane %v511, 1
        %v514 = vsel %vm478, %v509, %v513
        %v515 = vshrl.u32 %v460, 16
        %v517 = vor.u32 %v515, %v513
        %v519 = vshll.u32 %v461, 16
        %v521 = vrot.slane %v519, 1
        %v522 = vsel %vm478, %v517, %v521
        %v523 = vshrl.u32 %v461, 16
        %v525 = vor.u32 %v523, %v521
        %v527 = vshll.u32 %v477, 16
        %v529 = vrot.slane %v527, 1
        %v530 = vsel %vm478, %v525, %v529
        %531 = vrot.lane.b32.xlu0 %v490, 32
        %v532 = vpop.permute.xlu0 %531
        %533 = vrot.lane.b32.xlu0 %v498, 32
        %v534 = vpop.permute.xlu0 %533
        %535 = vrot.lane.b32.xlu0 %v506, 32
        %v536 = vpop.permute.xlu0 %535
        %537 = vrot.lane.b32.xlu0 %v514, 32
        %v538 = vpop.permute.xlu0 %537
        %539 = vrot.lane.b32.xlu0 %v522, 32
        %v540 = vpop.permute.xlu0 %539
        %541 = vrot.lane.b32.xlu0 %v530, 32
        %v542 = vpop.permute.xlu0 %541
        %vm549 = vcmask 523520
        %550 = vst.msk [vmem:[#allocation2] sm:$0xff] %vm549, %v532
        %551 = vst.msk [vmem:[#allocation2 + $0x8] sm:$0xff] %vm549, %v534
        %552 = vst.msk [vmem:[#allocation2 + $0x10] sm:$0xff] %vm549, %v536
        %553 = vst.msk [vmem:[#allocation2 + $0x18] sm:$0xff] %vm549, %v538
        %554 = vst.msk [vmem:[#allocation2 + $0x20] sm:$0xff] %vm549, %v540
        %555 = vst.msk [vmem:[#allocation2 + $0x28] sm:$0xff] %vm549, %v542
        %vm556 = vcmask 1046528
        %v557 = vrot.slane %v456, 1
        %v558 = vrot.slane %v457, 1
        %v559 = vsel %vm556, %v557, %v558
        %v560 = vrot.slane %v458, 1
        %v561 = vsel %vm556, %v558, %v560
        %v562 = vrot.slane %v459, 1
        %v563 = vsel %vm556, %v560, %v562
        %v564 = vrot.slane %v460, 1
        %v565 = vsel %vm556, %v562, %v564
        %v566 = vrot.slane %v461, 1
        %v567 = vsel %vm556, %v564, %v566
        %v568 = vrot.slane %v477, 1
        %v569 = vsel %vm556, %v566, %v568
        %570 = vrot.lane.b32.xlu0 %v559, 64
        %v571 = vpop.permute.xlu0 %570
        %572 = vrot.lane.b32.xlu0 %v561, 64
        %v573 = vpop.permute.xlu0 %572
        %574 = vrot.lane.b32.xlu0 %v563, 64
        %v575 = vpop.permute.xlu0 %574
        %576 = vrot.lane.b32.xlu0 %v565, 64
        %v577 = vpop.permute.xlu0 %576
        %578 = vrot.lane.b32.xlu0 %v567, 64
        %v579 = vpop.permute.xlu0 %578
        %580 = vrot.lane.b32.xlu0 %v569, 64
        %v581 = vpop.permute.xlu0 %580
        %vm588 = vcmask 785920
        %589 = vst.msk [vmem:[#allocation2] sm:$0xff] %vm588, %v571
        %590 = vst.msk [vmem:[#allocation2 + $0x8] sm:$0xff] %vm588, %v573
        %591 = vst.msk [vmem:[#allocation2 + $0x10] sm:$0xff] %vm588, %v575
        %592 = vst.msk [vmem:[#allocation2 + $0x18] sm:$0xff] %vm588, %v577
        %593 = vst.msk [vmem:[#allocation2 + $0x20] sm:$0xff] %vm588, %v579
        %594 = vst.msk [vmem:[#allocation2 + $0x28] sm:$0xff] %vm588, %v581
        %v595 = vld [vmem:[#allocation2] sm:$0xff]
        %v596 = vld [vmem:[#allocation2 + $0x8] sm:$0xff]
        %v597 = vld [vmem:[#allocation2 + $0x10] sm:$0xff]
        %v598 = vld [vmem:[#allocation2 + $0x18] sm:$0xff]
        %v599 = vld [vmem:[%s1] sm:$0xf]
        %v600 = vld [vmem:[%s1 + $0x4] sm:$0xf]
        %v601 = vld [vmem:[%s1 + $0x8] sm:$0xf]
        %v602 = vld [vmem:[%s1 + $0xc] sm:$0xf]
        %v603 = vld [vmem:[%s1 + $0x10] sm:$0xf]
        %v604 = vld [vmem:[%s1 + $0x14] sm:$0xf]
        %v605 = vld [vmem:[%s1 + $0x18] sm:$0xf]
        %v606 = vld [vmem:[%s1 + $0x1c] sm:$0xf]
        %v607 = vld [vmem:[%s1 + $0x20] sm:$0xf]
        %v608 = vld [vmem:[%s1 + $0x24] sm:$0xf]
        %v609 = vld [vmem:[%s1 + $0x28] sm:$0xf]
        %v610 = vld [vmem:[%s1 + $0x2c] sm:$0xf]
        %v611 = vld [vmem:[#allocation2 + $0x20] sm:$0xff]
        %s612 = scalar_lea.vmem %s1, 48
        %v613 = vld [vmem:[%s612] sm:$0xf]
        %v614 = vld [vmem:[%s612 + $0x4] sm:$0xf]
        %v615 = vld [vmem:[%s612 + $0x8] sm:$0xf]
        %v616 = vld [vmem:[%s612 + $0xc] sm:$0xf]
        %v617 = vld [vmem:[%s612 + $0x10] sm:$0xf]
        %v618 = vld [vmem:[%s612 + $0x14] sm:$0xf]
        %v619 = vld [vmem:[%s612 + $0x18] sm:$0xf]
        %v620 = vld [vmem:[%s612 + $0x1c] sm:$0xf]
        %v621 = vld [vmem:[%s612 + $0x20] sm:$0xf]
        %v622 = vld [vmem:[%s612 + $0x24] sm:$0xf]
        %v623 = vld [vmem:[%s612 + $0x28] sm:$0xf]
        %v624 = vld [vmem:[%s612 + $0x2c] sm:$0xf]
        %v637 = vunpack.c.l.b16 %v613
        %v638 = vunpack.c.l.b16 %v614
        %v639 = vunpack.c.l.b16 %v615
        %v640 = vunpack.c.l.b16 %v616
        %v641 = vunpack.c.l.b16 %v617
        %v642 = vunpack.c.l.b16 %v618
        %v643 = vunpack.c.l.b16 %v619
        %v644 = vunpack.c.l.b16 %v620
        %v645 = vunpack.c.l.b16 %v621
        %v646 = vunpack.c.l.b16 %v622
        %v647 = vunpack.c.l.b16 %v623
        %v648 = vunpack.c.l.b16 %v624
        %v649 = vpack.c.b16 %v638, %v637
        %v650 = vpack.c.b16 %v640, %v639
        %v651 = vpack.c.b16 %v642, %v641
        %v652 = vpack.c.b16 %v644, %v643
        %v653 = vpack.c.b16 %v646, %v645
        %v654 = vpack.c.b16 %v648, %v647
        %vm661 = vcmask 785408
        %v663 = vsel %vm661, %v596, 0
        %v666 = vsel %vm661, %v597, 0
        %v669 = vsel %vm661, %v598, 0
        %v672 = vsel %vm661, %v611, 0
        %674 = vmatprep.subr.bf16.mxu0 0
        %675 = vmatpush1.bf16.msra.mxu0 %v649
        %676 = vmatprep.subr.bf16.mxu0 0
        %677 = vmatpush1.bf16.msra.mxu0 %v650
        %678 = vmatprep.subr.bf16.mxu0 0
        %679 = vmatpush1.bf16.msra.mxu0 %v651
        %680 = vmatprep.subr.bf16.mxu0 0
        %681 = vmatpush1.bf16.msra.mxu0 %v652
        %682 = vmatprep.subr.bf16.mxu0 0
        %683 = vmatpush1.bf16.msra.mxu0 %v653
        %684 = vmatprep.subr.bf16.mxu0 0
        %685 = vmatpush1.bf16.msra.mxu0 %v654
        %686 = vmatprep.subr.bf16.mxu0 0
        %687 = vmatpush1.bf16.msra.mxu0 0
        %688 = vmatprep.subr.bf16.mxu0 0
        %689 = vmatpush1.bf16.msra.mxu0 0
        %690 = vmatprep.subr.bf16.mxu0 0
        %691 = vmatpush1.bf16.msra.mxu0 0
        %692 = vmatprep.subr.bf16.mxu0 0
        %693 = vmatpush1.bf16.msra.mxu0 0
        %694 = vmatprep.subr.bf16.mxu0 0
        %695 = vmatpush1.bf16.msra.mxu0 0
        %696 = vmatprep.subr.bf16.mxu0 0
        %697 = vmatpush1.bf16.msra.mxu0 0
        %698 = vmatprep.subr.bf16.mxu0 0
        %699 = vmatpush1.bf16.msra.mxu0 0
        %700 = vmatprep.subr.bf16.mxu0 0
        %701 = vmatpush1.bf16.msra.mxu0 0
        %702 = vmatprep.subr.bf16.mxu0 0
        %703 = vmatpush1.bf16.msra.mxu0 0
        %704 = vmatprep.subr.bf16.mxu0 0
        %705 = vmatpush1.bf16.msra.mxu0 0
        %706 = vmatprep.mubr.bf16.mxu0 0
        %707 = vmatmul.mubr.bf16.gmra.mrb[0].mxu0 %v663
        %v708 = vpop.f32.mrb[0].mxu0
        %v709 = vadd.f32 0.0, %v708
        %v710 = vpop.f32.mrb[0].mxu0
        %v711 = vpop.f32.mrb[0].mxu0
        %v712 = vadd.f32 0.0, %v711
        %v713 = vpop.f32.mrb[0].mxu0
        %714 = vmatprep.mubr.bf16.mxu0 0
        %715 = vmatmul.mubr.bf16.gmra.mrb[0].mxu0 %v666
        %v716 = vpop.f32.mrb[0].mxu0
        %v717 = vadd.f32 0.0, %v716
        %v718 = vpop.f32.mrb[0].mxu0
        %v719 = vpop.f32.mrb[0].mxu0
        %v720 = vadd.f32 0.0, %v719
        %v721 = vpop.f32.mrb[0].mxu0
        %722 = vmatprep.mubr.bf16.mxu0 0
        %723 = vmatmul.mubr.bf16.gmra.mrb[0].mxu0 %v669
        %v724 = vpop.f32.mrb[0].mxu0
        %v725 = vadd.f32 0.0, %v724
        %v726 = vpop.f32.mrb[0].mxu0
        %v727 = vpop.f32.mrb[0].mxu0
        %v728 = vadd.f32 0.0, %v727
        %v729 = vpop.f32.mrb[0].mxu0
        %730 = vmatprep.mubr.bf16.mxu0 0
        %731 = vmatmul.mubr.bf16.gmra.mrb[0].mxu0 %v672
        %v732 = vpop.f32.mrb[0].mxu0
        %v733 = vadd.f32 0.0, %v732
        %v734 = vpop.f32.mrb[0].mxu0
        %v735 = vpop.f32.mrb[0].mxu0
        %v736 = vadd.f32 0.0, %v735
        %v737 = vpop.f32.mrb[0].mxu0
        %738 = vdwg.mxu0
        %v751 = vunpack.c.l.b16 %v599
        %v752 = vunpack.c.l.b16 %v600
        %v753 = vunpack.c.l.b16 %v601
        %v754 = vunpack.c.l.b16 %v602
        %v755 = vunpack.c.l.b16 %v603
        %v756 = vunpack.c.l.b16 %v604
        %v757 = vunpack.c.l.b16 %v605
        %v758 = vunpack.c.l.b16 %v606
        %v759 = vunpack.c.l.b16 %v607
        %v760 = vunpack.c.l.b16 %v608
        %v761 = vunpack.c.l.b16 %v609
        %v762 = vunpack.c.l.b16 %v610
        %v763 = vpack.c.b16 %v752, %v751
        %v764 = vpack.c.b16 %v754, %v753
        %v765 = vpack.c.b16 %v756, %v755
        %v766 = vpack.c.b16 %v758, %v757
        %v767 = vpack.c.b16 %v760, %v759
        %v768 = vpack.c.b16 %v762, %v761
        %v776 = vsel %vm661, %v595, 0
        %778 = vmatprep.subr.bf16.mxu0 0
        %779 = vmatpush1.bf16.msra.mxu0 %v763
        %780 = vmatprep.subr.bf16.mxu0 0
        %781 = vmatpush1.bf16.msra.mxu0 %v764
        %782 = vmatprep.subr.bf16.mxu0 0
        %783 = vmatpush1.bf16.msra.mxu0 %v765
        %784 = vmatprep.subr.bf16.mxu0 0
        %785 = vmatpush1.bf16.msra.mxu0 %v766
        %786 = vmatprep.subr.bf16.mxu0 0
        %787 = vmatpush1.bf16.msra.mxu0 %v767
        %788 = vmatprep.subr.bf16.mxu0 0
        %789 = vmatpush1.bf16.msra.mxu0 %v768
        %790 = vmatprep.subr.bf16.mxu0 0
        %791 = vmatpush1.bf16.msra.mxu0 0
        %792 = vmatprep.subr.bf16.mxu0 0
        %793 = vmatpush1.bf16.msra.mxu0 0
        %794 = vmatprep.subr.bf16.mxu0 0
        %795 = vmatpush1.bf16.msra.mxu0 0
        %796 = vmatprep.subr.bf16.mxu0 0
        %797 = vmatpush1.bf16.msra.mxu0 0
        %798 = vmatprep.subr.bf16.mxu0 0
        %799 = vmatpush1.bf16.msra.mxu0 0
        %800 = vmatprep.subr.bf16.mxu0 0
        %801 = vmatpush1.bf16.msra.mxu0 0
        %802 = vmatprep.subr.bf16.mxu0 0
        %803 = vmatpush1.bf16.msra.mxu0 0
        %804 = vmatprep.subr.bf16.mxu0 0
        %805 = vmatpush1.bf16.msra.mxu0 0
        %806 = vmatprep.subr.bf16.mxu0 0
        %807 = vmatpush1.bf16.msra.mxu0 0
        %808 = vmatprep.subr.bf16.mxu0 0
        %809 = vmatpush1.bf16.msra.mxu0 0
        %810 = vmatprep.mubr.bf16.mxu0 0
        %811 = vmatmul.mubr.bf16.gmra.mrb[0].mxu0 %v776
        %v812 = vpop.f32.mrb[0].mxu0
        %v813 = vadd.f32 %v709, %v812
        %v814 = vpop.f32.mrb[0].mxu0
        %v815 = vpop.f32.mrb[0].mxu0
        %v816 = vadd.f32 %v712, %v815
        %v817 = vpop.f32.mrb[0].mxu0
        %818 = vmatprep.mubr.bf16.mxu0 0
        %819 = vmatmul.mubr.bf16.gmra.mrb[0].mxu0 %v663
        %v820 = vpop.f32.mrb[0].mxu0
        %v821 = vadd.f32 %v717, %v820
        %v822 = vpop.f32.mrb[0].mxu0
        %v823 = vpop.f32.mrb[0].mxu0
        %v824 = vadd.f32 %v720, %v823
        %v825 = vpop.f32.mrb[0].mxu0
        %826 = vmatprep.mubr.bf16.mxu0 0
        %827 = vmatmul.mubr.bf16.gmra.mrb[0].mxu0 %v666
        %v828 = vpop.f32.mrb[0].mxu0
        %v829 = vadd.f32 %v725, %v828
        %v830 = vpop.f32.mrb[0].mxu0
        %v831 = vpop.f32.mrb[0].mxu0
        %v832 = vadd.f32 %v728, %v831
        %v833 = vpop.f32.mrb[0].mxu0
        %834 = vmatprep.mubr.bf16.mxu0 0
        %835 = vmatmul.mubr.bf16.gmra.mrb[0].mxu0 %v669
        %v836 = vpop.f32.mrb[0].mxu0
        %v837 = vadd.f32 %v733, %v836
        %v838 = vpop.f32.mrb[0].mxu0
        %v839 = vpop.f32.mrb[0].mxu0
        %v840 = vadd.f32 %v736, %v839
        %v841 = vpop.f32.mrb[0].mxu0
        %842 = vdwg.mxu0
        %v843 = vld [vmem:[#allocation2 + $0x10] sm:$0xff]
        %v844 = vld [vmem:[#allocation2 + $0x18] sm:$0xff]
        %v845 = vld [vmem:[#allocation2 + $0x20] sm:$0xff]
        %v846 = vld [vmem:[#allocation2 + $0x28] sm:$0xff]
        %s847 = scalar_lea.vmem %s1, 96
        %v848 = vld [vmem:[%s847] sm:$0xf]
        %v849 = vld [vmem:[%s847 + $0x4] sm:$0xf]
        %v850 = vld [vmem:[%s847 + $0x8] sm:$0xf]
        %v851 = vld [vmem:[%s847 + $0xc] sm:$0xf]
        %v852 = vld [vmem:[%s847 + $0x10] sm:$0xf]
        %v853 = vld [vmem:[%s847 + $0x14] sm:$0xf]
        %v854 = vld [vmem:[%s847 + $0x18] sm:$0xf]
        %v855 = vld [vmem:[%s847 + $0x1c] sm:$0xf]
        %v856 = vld [vmem:[%s847 + $0x20] sm:$0xf]
        %v857 = vld [vmem:[%s847 + $0x24] sm:$0xf]
        %v858 = vld [vmem:[%s847 + $0x28] sm:$0xf]
        %v859 = vld [vmem:[%s847 + $0x2c] sm:$0xf]
        %v872 = vunpack.c.l.b16 %v848
        %v873 = vunpack.c.l.b16 %v849
        %v874 = vunpack.c.l.b16 %v850
        %v875 = vunpack.c.l.b16 %v851
        %v876 = vunpack.c.l.b16 %v852
        %v877 = vunpack.c.l.b16 %v853
        %v878 = vunpack.c.l.b16 %v854
        %v879 = vunpack.c.l.b16 %v855
        %v880 = vunpack.c.l.b16 %v856
        %v881 = vunpack.c.l.b16 %v857
        %v882 = vunpack.c.l.b16 %v858
        %v883 = vunpack.c.l.b16 %v859
        %v884 = vpack.c.b16 %v873, %v872
        %v885 = vpack.c.b16 %v875, %v874
        %v886 = vpack.c.b16 %v877, %v876
        %v887 = vpack.c.b16 %v879, %v878
        %v888 = vpack.c.b16 %v881, %v880
        %v889 = vpack.c.b16 %v883, %v882
        %v897 = vsel %vm661, %v843, 0
        %v900 = vsel %vm661, %v844, 0
        %v903 = vsel %vm661, %v845, 0
        %v906 = vsel %vm661, %v846, 0
        %908 = vmatprep.subr.bf16.mxu0 0
        %909 = vmatpush1.bf16.msra.mxu0 %v884
        %910 = vmatprep.subr.bf16.mxu0 0
        %911 = vmatpush1.bf16.msra.mxu0 %v885
        %912 = vmatprep.subr.bf16.mxu0 0
        %913 = vmatpush1.bf16.msra.mxu0 %v886
        %914 = vmatprep.subr.bf16.mxu0 0
        %915 = vmatpush1.bf16.msra.mxu0 %v887
        %916 = vmatprep.subr.bf16.mxu0 0
        %917 = vmatpush1.bf16.msra.mxu0 %v888
        %918 = vmatprep.subr.bf16.mxu0 0
        %919 = vmatpush1.bf16.msra.mxu0 %v889
        %920 = vmatprep.subr.bf16.mxu0 0
        %921 = vmatpush1.bf16.msra.mxu0 0
        %922 = vmatprep.subr.bf16.mxu0 0
        %923 = vmatpush1.bf16.msra.mxu0 0
        %924 = vmatprep.subr.bf16.mxu0 0
        %925 = vmatpush1.bf16.msra.mxu0 0
        %926 = vmatprep.subr.bf16.mxu0 0
        %927 = vmatpush1.bf16.msra.mxu0 0
        %928 = vmatprep.subr.bf16.mxu0 0
        %929 = vmatpush1.bf16.msra.mxu0 0
        %930 = vmatprep.subr.bf16.mxu0 0
        %931 = vmatpush1.bf16.msra.mxu0 0
        %932 = vmatprep.subr.bf16.mxu0 0
        %933 = vmatpush1.bf16.msra.mxu0 0
        %934 = vmatprep.subr.bf16.mxu0 0
        %935 = vmatpush1.bf16.msra.mxu0 0
        %936 = vmatprep.subr.bf16.mxu0 0
        %937 = vmatpush1.bf16.msra.mxu0 0
        %938 = vmatprep.subr.bf16.mxu0 0
        %939 = vmatpush1.bf16.msra.mxu0 0
        %940 = vmatprep.mubr.bf16.mxu0 0
        %941 = vmatmul.mubr.bf16.gmra.mrb[0].mxu0 %v897
        %v942 = vpop.f32.mrb[0].mxu0
        %v943 = vadd.f32 0.0, %v942
        %v944 = vpop.f32.mrb[0].mxu0
        %v945 = vpop.f32.mrb[0].mxu0
        %v946 = vadd.f32 0.0, %v945
        %v947 = vpop.f32.mrb[0].mxu0
        %948 = vmatprep.mubr.bf16.mxu0 0
        %949 = vmatmul.mubr.bf16.gmra.mrb[0].mxu0 %v900
        %v950 = vpop.f32.mrb[0].mxu0
        %v951 = vadd.f32 0.0, %v950
        %v952 = vpop.f32.mrb[0].mxu0
        %v953 = vpop.f32.mrb[0].mxu0
        %v954 = vadd.f32 0.0, %v953
        %v955 = vpop.f32.mrb[0].mxu0
        %956 = vmatprep.mubr.bf16.mxu0 0
        %957 = vmatmul.mubr.bf16.gmra.mrb[0].mxu0 %v903
        %v958 = vpop.f32.mrb[0].mxu0
        %v959 = vadd.f32 0.0, %v958
        %v960 = vpop.f32.mrb[0].mxu0
        %v961 = vpop.f32.mrb[0].mxu0
        %v962 = vadd.f32 0.0, %v961
        %v963 = vpop.f32.mrb[0].mxu0
        %964 = vmatprep.mubr.bf16.mxu0 0
        %965 = vmatmul.mubr.bf16.gmra.mrb[0].mxu0 %v906
        %v966 = vpop.f32.mrb[0].mxu0
        %v967 = vadd.f32 0.0, %v966
        %v968 = vpop.f32.mrb[0].mxu0
        %v969 = vpop.f32.mrb[0].mxu0
        %v970 = vadd.f32 0.0, %v969
        %v971 = vpop.f32.mrb[0].mxu0
        %972 = vdwg.mxu0
        %v973 = vadd.f32 %v813, %v943
        %v974 = vadd.f32 %v816, %v946
        %v975 = vadd.f32 %v821, %v951
        %v976 = vadd.f32 %v824, %v954
        %v977 = vadd.f32 %v829, %v959
        %v978 = vadd.f32 %v832, %v962
        %v979 = vadd.f32 %v837, %v967
        %v980 = vadd.f32 %v840, %v970
        %v981 = vld [vmem:[%s2] sm:$0x1]
        %v983 = vlaneseq
        %v984 = vshrl.u32 %v983, 7
        %v985 = vsub.s32 0, %v984
        %v986 = vrot.slane %v981, %v985
        %v988 = vadd.f32 %v973, %v986
        %v989 = vadd.f32 %v974, %v986
        %v990 = vadd.f32 %v975, %v986
        %v991 = vadd.f32 %v976, %v986
        %v992 = vadd.f32 %v977, %v986
        %v993 = vadd.f32 %v978, %v986
        %v994 = vadd.f32 %v979, %v986
        %v995 = vadd.f32 %v980, %v986
        %v996 = vmax.f32 %v988, 0.0
        %v997 = vmax.f32 %v989, 0.0
        %v998 = vmax.f32 %v990, 0.0
        %v999 = vmax.f32 %v991, 0.0
        %v1000 = vmax.f32 %v992, 0.0
        %v1001 = vmax.f32 %v993, 0.0
        %v1002 = vmax.f32 %v994, 0.0
        %v1003 = vmax.f32 %v995, 0.0
        %v1004 = vpack.c.bf16 %v997, %v996
        %v1005 = vpack.c.bf16 %v999, %v998
        %v1006 = vpack.c.bf16 %v1001, %v1000
        %v1007 = vpack.c.bf16 %v1003, %v1002
        %v1008 = vld [vmem:[%s3] sm:$0xf]
        %v1009 = vld [vmem:[%s3 + $0x4] sm:$0xf]
        %v1010 = vld [vmem:[%s3 + $0x8] sm:$0xf]
        %v1011 = vld [vmem:[%s3 + $0xc] sm:$0xf]
        %v1012 = vld [vmem:[%s4] sm:$0x1]
        %v1014 = vlaneseq
        %v1015 = vshrl.u32 %v1014, 7
        %v1016 = vsub.s32 0, %v1015
        %v1017 = vrot.slane %v1012, %v1016
        %v1023 = vunpack.c.l.b16 %v1008
        %v1024 = vunpack.c.l.b16 %v1009
        %v1025 = vunpack.c.l.b16 %v1010
        %v1026 = vunpack.c.l.b16 %v1011
        %v1027 = vpack.c.b16 %v1024, %v1023
        %v1028 = vpack.c.b16 %v1026, %v1025
        %v1032 = vsel %vm468, %v1004, 0
        %v1035 = vsel %vm468, %v1005, 0
        %v1038 = vsel %vm468, %v1006, 0
        %v1041 = vsel %vm468, %v1007, 0
        %1043 = vmatprep.subr.bf16.mxu0 0
        %1044 = vmatpush1.bf16.msra.mxu0 %v1027
        %1045 = vmatprep.subr.bf16.mxu0 0
        %1046 = vmatpush1.bf16.msra.mxu0 %v1028
        %1047 = vmatprep.subr.bf16.mxu0 0
        %1048 = vmatpush1.bf16.msra.mxu0 0
        %1049 = vmatprep.subr.bf16.mxu0 0
        %1050 = vmatpush1.bf16.msra.mxu0 0
        %1051 = vmatprep.subr.bf16.mxu0 0
        %1052 = vmatpush1.bf16.msra.mxu0 0
        %1053 = vmatprep.subr.bf16.mxu0 0
        %1054 = vmatpush1.bf16.msra.mxu0 0
        %1055 = vmatprep.subr.bf16.mxu0 0
        %1056 = vmatpush1.bf16.msra.mxu0 0
        %1057 = vmatprep.subr.bf16.mxu0 0
        %1058 = vmatpush1.bf16.msra.mxu0 0
        %1059 = vmatprep.subr.bf16.mxu0 0
        %1060 = vmatpush1.bf16.msra.mxu0 0
        %1061 = vmatprep.subr.bf16.mxu0 0
        %1062 = vmatpush1.bf16.msra.mxu0 0
        %1063 = vmatprep.subr.bf16.mxu0 0
        %1064 = vmatpush1.bf16.msra.mxu0 0
        %1065 = vmatprep.subr.bf16.mxu0 0
        %1066 = vmatpush1.bf16.msra.mxu0 0
        %1067 = vmatprep.subr.bf16.mxu0 0
        %1068 = vmatpush1.bf16.msra.mxu0 0
        %1069 = vmatprep.subr.bf16.mxu0 0
        %1070 = vmatpush1.bf16.msra.mxu0 0
        %1071 = vmatprep.subr.bf16.mxu0 0
        %1072 = vmatpush1.bf16.msra.mxu0 0
        %1073 = vmatprep.subr.bf16.mxu0 0
        %1074 = vmatpush1.bf16.msra.mxu0 0
        %1075 = vmatprep.mubr.bf16.mxu0 0
        %1076 = vmatmul.mubr.bf16.gmra.mrb[0].mxu0 %v1032
        %v1077 = vpop.f32.mrb[0].mxu0
        %v1078 = vadd.f32 %v1017, %v1077
        %v1079 = vpop.f32.mrb[0].mxu0
        %v1080 = vpop.f32.mrb[0].mxu0
        %v1081 = vadd.f32 %v1017, %v1080
        %v1082 = vpop.f32.mrb[0].mxu0
        %1083 = vmatprep.mubr.bf16.mxu0 0
        %1084 = vmatmul.mubr.bf16.gmra.mrb[0].mxu0 %v1035
        %v1085 = vpop.f32.mrb[0].mxu0
        %v1086 = vadd.f32 %v1017, %v1085
        %v1087 = vpop.f32.mrb[0].mxu0
        %v1088 = vpop.f32.mrb[0].mxu0
        %v1089 = vadd.f32 %v1017, %v1088
        %v1090 = vpop.f32.mrb[0].mxu0
        %1091 = vmatprep.mubr.bf16.mxu0 0
        %1092 = vmatmul.mubr.bf16.gmra.mrb[0].mxu0 %v1038
        %v1093 = vpop.f32.mrb[0].mxu0
        %v1094 = vadd.f32 %v1017, %v1093
        %v1095 = vpop.f32.mrb[0].mxu0
        %v1096 = vpop.f32.mrb[0].mxu0
        %v1097 = vadd.f32 %v1017, %v1096
        %v1098 = vpop.f32.mrb[0].mxu0
        %1099 = vmatprep.mubr.bf16.mxu0 0
        %1100 = vmatmul.mubr.bf16.gmra.mrb[0].mxu0 %v1041
        %v1101 = vpop.f32.mrb[0].mxu0
        %v1102 = vadd.f32 %v1017, %v1101
        %v1103 = vpop.f32.mrb[0].mxu0
        %v1104 = vpop.f32.mrb[0].mxu0
        %v1105 = vadd.f32 %v1017, %v1104
        %v1106 = vpop.f32.mrb[0].mxu0
        %1107 = vdwg.mxu0
        %1108 = vst [vmem:[%s387] sm:$0xff] %v1078
        %1109 = vst [vmem:[%s387 + $0x8] sm:$0xff] %v1081
        %1110 = vst [vmem:[%s387 + $0x10] sm:$0xff] %v1086
        %1111 = vst [vmem:[%s387 + $0x18] sm:$0xff] %v1089
        %1112 = vst [vmem:[%s387 + $0x20] sm:$0xff] %v1094
        %1113 = vst [vmem:[%s387 + $0x28] sm:$0xff] %v1097
        %1114 = vst [vmem:[%s387 + $0x30] sm:$0xff] %v1102
        %1115 = vst [vmem:[%s387 + $0x38] sm:$0xff] %v1105
        %v1116 = vld [vmem:[%s7] sm:$0x1]
        %vm1117 = vcmp.gt.f32.partialorder %v1116, 0.5
        %v1118 = vmul.f32 %v1078, 1.442695
        %v1119 = vpow.pop %v1118
        %v1120 = vmul.f32 %v1081, 1.442695
        %v1121 = vpow.pop %v1120
        %v1122 = vmul.f32 %v1086, 1.442695
        %v1123 = vpow.pop %v1122
        %v1124 = vmul.f32 %v1089, 1.442695
        %v1125 = vpow.pop %v1124
        %v1126 = vmul.f32 %v1094, 1.442695
        %v1127 = vpow.pop %v1126
        %v1128 = vmul.f32 %v1097, 1.442695
        %v1129 = vpow.pop %v1128
        %v1130 = vmul.f32 %v1102, 1.442695
        %v1131 = vpow.pop %v1130
        %v1132 = vmul.f32 %v1105, 1.442695
        %v1133 = vpow.pop %v1132
        %v1134 = vsel %vm1117, 1, 0
        %v1135 = vlaneseq
        %v1136 = vshrl.u32 %v1135, 7
        %v1137 = vsub.s32 0, %v1136
        %v1138 = vrot.slane %v1134, %v1137
        %vm1139 = vcmp.eq.s32.totalorder %v1138, 1
        %v1140 = vsel %vm1139, %v1078, %v1119
        %v1141 = vsel %vm1139, %v1081, %v1121
        %v1142 = vsel %vm1139, %v1086, %v1123
        %v1143 = vsel %vm1139, %v1089, %v1125
        %v1144 = vsel %vm1139, %v1094, %v1127
        %v1145 = vsel %vm1139, %v1097, %v1129
        %v1146 = vsel %vm1139, %v1102, %v1131
        %v1147 = vsel %vm1139, %v1105, %v1133
        %v1148 = vld [vmem:[%s408] sm:$0xff]
        %v1149 = vld [vmem:[%s408 + $0x8] sm:$0xff]
        %v1150 = vld [vmem:[%s408 + $0x10] sm:$0xff]
        %v1151 = vld [vmem:[%s408 + $0x18] sm:$0xff]
        %v1152 = vld [vmem:[%s408 + $0x20] sm:$0xff]
        %v1153 = vld [vmem:[%s408 + $0x28] sm:$0xff]
        %v1154 = vld [vmem:[%s408 + $0x30] sm:$0xff]
        %v1155 = vld [vmem:[%s408 + $0x38] sm:$0xff]
        %v1156 = vmul.f32 %v1140, %v1148
        %v1157 = vmul.f32 %v1141, %v1149
        %v1158 = vmul.f32 %v1142, %v1150
        %v1159 = vmul.f32 %v1143, %v1151
        %v1160 = vmul.f32 %v1144, %v1152
        %v1161 = vmul.f32 %v1145, %v1153
        %v1162 = vmul.f32 %v1146, %v1154
        %v1163 = vmul.f32 %v1147, %v1155
        %v1164 = vld [vmem:[%s414] sm:$0xff]
        %v1165 = vld [vmem:[%s414 + $0x8] sm:$0xff]
        %v1166 = vld [vmem:[%s414 + $0x10] sm:$0xff]
        %v1167 = vld [vmem:[%s414 + $0x18] sm:$0xff]
        %v1168 = vld [vmem:[%s414 + $0x20] sm:$0xff]
        %v1169 = vld [vmem:[%s414 + $0x28] sm:$0xff]
        %v1170 = vld [vmem:[%s414 + $0x30] sm:$0xff]
        %v1171 = vld [vmem:[%s414 + $0x38] sm:$0xff]
        %v1172 = vadd.f32 %v1156, %v1164
        %v1173 = vadd.f32 %v1157, %v1165
        %v1174 = vadd.f32 %v1158, %v1166
        %v1175 = vadd.f32 %v1159, %v1167
        %v1176 = vadd.f32 %v1160, %v1168
        %v1177 = vadd.f32 %v1161, %v1169
        %v1178 = vadd.f32 %v1162, %v1170
        %v1179 = vadd.f32 %v1163, %v1171
        %1180 = vst [vmem:[%s394] sm:$0xff] %v1172
        %1181 = vst [vmem:[%s394 + $0x8] sm:$0xff] %v1173
        %1182 = vst [vmem:[%s394 + $0x10] sm:$0xff] %v1174
        %1183 = vst [vmem:[%s394 + $0x18] sm:$0xff] %v1175
        %1184 = vst [vmem:[%s394 + $0x20] sm:$0xff] %v1176
        %1185 = vst [vmem:[%s394 + $0x28] sm:$0xff] %v1177
        %1186 = vst [vmem:[%s394 + $0x30] sm:$0xff] %v1178
        %1187 = vst [vmem:[%s394 + $0x38] sm:$0xff] %v1179
        %s1188 = sand.u32 %s234, 1
        %s1189 = scalar_lea.sflag [#allocation4], %s1188
        %s1190 = sand.u32 %s234, 1
        %s1191 = smul.addr %s1190, 64
        %s1192 = scalar_lea.vmem [#allocation3], %s1191
        %s1193 = sand.u32 %s262, 1
        %s1194 = scalar_lea.sflag [#allocation6], %s1193
        %s1195 = sand.u32 %s262, 1
        %s1196 = smul.addr %s1195, 64
        %s1197 = scalar_lea.vmem [#allocation5], %s1196
        // Predicated region
        $region53: #{tpu_custom_call.1} parent=51 // pred_check
          %p1198 = pneg %p244
        $region54: #{tpu_custom_call.1} parent=51 // pred_check_branch
          %1200 = sbr.rel (%p1198) target = $region56
        $region55: #{tpu_custom_call.1} parent=51 // pred_region
          %s1201 = smul.u32 8, %s32
          %s1203 = ssub.s32 1024, 1024
          %1204 = vsyncadd %s1189, %s1203
          %s1205 = smul.addr %s31, 16
          %s1206 = sadd.s32 %s1201, %s1205
          %s1207 = smul.addr %s1206, 128
          %s1208 = scalar_lea.hbm %s8, %s1207
          %s1209 = sshll.u32 %s1192, 4
          %s1210 = int_to_ptr.vmem [resolvable:$true] %s1209
          %1215 = dma.vmem_to_hbm [thread:$0]  %s1210, 1024, %s1208, %s1189, 128, 128, 8
        $region56: #{tpu_custom_call.1} parent=51 // pred_fallthru
          _
        // Predicated region
        $region57: #{tpu_custom_call.1} parent=51 // pred_check
          %p1216 = pneg %p272
        $region58: #{tpu_custom_call.1} parent=51 // pred_check_branch
          %1218 = sbr.rel (%p1216) target = $region60
        $region59: #{tpu_custom_call.1} parent=51 // pred_region
          %s1219 = smul.u32 8, %s32
          %s1221 = ssub.s32 1024, 1024
          %1222 = vsyncadd %s1194, %s1221
          %s1223 = smul.addr %s31, 16
          %s1224 = sadd.s32 %s1219, %s1223
          %s1225 = smul.addr %s1224, 128
          %s1226 = scalar_lea.hbm %s9, %s1225
          %s1227 = sshll.u32 %s1197, 4
          %s1228 = int_to_ptr.vmem [resolvable:$true] %s1227
          %1233 = dma.vmem_to_hbm [thread:$0]  %s1228, 1024, %s1226, %s1194, 128, 128, 8
        $region60: #{tpu_custom_call.1} parent=51 // pred_fallthru
          _
      $region52: #{tpu_custom_call.1} parent=5 // pred_fallthru
        _
      %p1234 = scmp.le.s32.totalorder 2, %s22
      // Predicated region
      $region61: #{tpu_custom_call.1} parent=5 // pred_check
        %p1235 = pneg %p1234
      $region62: #{tpu_custom_call.1} parent=5 // pred_check_branch
        %1237 = sbr.rel (%p1235) target = $region64
      $region63: #{tpu_custom_call.1} parent=5 // pred_region
        %s1238 = ssub.s32 %s22, 2
        // Predicated region
        $region65: #{tpu_custom_call.1} parent=63 // pred_check
          %p1239 = pneg %p250
        $region66: #{tpu_custom_call.1} parent=63 // pred_check_branch
          %1241 = sbr.rel (%p1239) target = $region68
        $region67: #{tpu_custom_call.1} parent=63 // pred_region
          %s1242 = sand.u32 %s235, 1
          %s1243 = scalar_lea.sflag [#allocation4], %s1242
          %s1244 = sand.u32 %s235, 1
          %s1245 = smul.addr %s1244, 64
          %s1246 = scalar_lea.vmem [#allocation3], %s1245
          %1247 = dma.done %s1243, 1024
        $region68: #{tpu_custom_call.1} parent=63 // pred_fallthru
          _
        // Predicated region
        $region69: #{tpu_custom_call.1} parent=63 // pred_check
          %p1248 = pneg %p278
        $region70: #{tpu_custom_call.1} parent=63 // pred_check_branch
          %1250 = sbr.rel (%p1248) target = $region72
        $region71: #{tpu_custom_call.1} parent=63 // pred_region
          %s1251 = sand.u32 %s263, 1
          %s1252 = scalar_lea.sflag [#allocation6], %s1251
          %s1253 = sand.u32 %s263, 1
          %s1254 = smul.addr %s1253, 64
          %s1255 = scalar_lea.vmem [#allocation5], %s1254
          %1256 = dma.done %s1252, 1024
        $region72: #{tpu_custom_call.1} parent=63 // pred_fallthru
          _
      $region64: #{tpu_custom_call.1} parent=5 // pred_fallthru
        _
    $region6: #{tpu_custom_call.1} parent=1 // loop_footer
      %s26 = sadd.s32 1, %s22
    $region7: #{tpu_custom_call.1} parent=1 // loop_footer_branch
      %21 = sbr.rel target = $region3
    $region8: #{tpu_custom_call.1} parent=1 // loop_exit
      _
    %1257 = vsyncpa [#allocation4], 1
    %s1258 = scalar_lea.sflag [#allocation4], 1
    %1259 = vsyncpa %s1258, 1
    %1260 = vsyncpa [#allocation6], 1
    %s1261 = scalar_lea.sflag [#allocation6], 1
    %1262 = vsyncpa %s1261, 1

</llo_original>
